<compile_context>
chip_gen: v7x
topology: tpu7x:2x2x1
jax: 0.10.0
libtpu: 0.0.40
codegen_flags: <defaults>
</compile_context>

<pallas_src>
import jax
import jax.numpy as jnp
from jax.experimental import pallas as pl
from jax.experimental.pallas import tpu as pltpu

IN_FEATURES = 784
NUM_CLASSES = 10
PADDED_CLASSES = 128          # lane-dense class dimension for the MXU / reductions


def _round_up(n, m):
    return ((n + m - 1) // m) * m


def _default_tile_b():
    # Per-generation batch tile (per review): v6e/v7x -> 2048 (fits 32 MiB default
    # scoped VMEM: ~13 MiB double-buffered x + ~0.8 MiB weights + small output);
    # v5e / unknown -> 1024 (fits 16 MiB default, per-step overhead already <10%).
    try:
        kind = jax.devices()[0].device_kind.lower()
    except Exception:
        return 1024
    if "v6" in kind or "v7" in kind:
        return 2048
    return 1024


def _linear_softmax_kernel(x_ref, w_ref, b_ref, o_ref):
    # x_ref: (tile_b, 784)   w_ref: (784, 128)   b_ref: (1, 128)   o_ref: (tile_b, 10)
    # logits = x @ W_rhs + b  (MXU matmul, f32 accumulation; padded lanes carry -1e30 bias)
    logits = jnp.dot(
        x_ref[...], w_ref[...],
        preferred_element_type=jnp.float32,
        precision=jax.lax.Precision.HIGHEST,   # extra bf16 passes hidden under DMA
    ) + b_ref[...]
    # Numerically stable softmax over the class (lane) axis. Padded lanes hold
    # -1e30 logits -> exp underflows to exactly 0, so max/sum ignore them.
    m = jnp.max(logits, axis=1, keepdims=True)
    e = jnp.exp(logits - m)
    denom = jnp.sum(e, axis=1, keepdims=True)
    probs = e / denom                          # exact normalization (VPU has huge slack)
    o_ref[...] = probs[:, :NUM_CLASSES].astype(o_ref.dtype)


def mnist_regression_forward(xb, weight, bias, tile_b=None):
    """Equivalent of MNISTRegressionModel.forward.

    xb:     any shape with 784 elements per sample (e.g. (B, 1, 28, 28)),
            float32 / bfloat16 (integers are cast to f32)
    weight: (10, 784) float32  (PyTorch nn.Linear layout)
    bias:   (10,)     float32
    returns (B, 10) float32 softmax probabilities
    """
    x = xb.reshape(-1, IN_FEATURES)            # glue reshape in plain JAX
    if not jnp.issubdtype(x.dtype, jnp.floating):
        x = x.astype(jnp.float32)              # (uint8 MNIST path; cheap, one pass)
    B = x.shape[0]

    if tile_b is None:
        tile_b = _default_tile_b()
    # Tile never larger than the 8-row-rounded batch; multiple of 8 for sublane tiling.
    tile_b = max(8, min(tile_b, _round_up(B, 8)))

    # Pre-transpose + pad weight to lane-dense (784, 128) MXU RHS; padded bias
    # lanes are -1e30 so the padded classes never contribute to max/sum.
    w_rhs = jnp.zeros((IN_FEATURES, PADDED_CLASSES), jnp.float32)
    w_rhs = w_rhs.at[:, :NUM_CLASSES].set(weight.astype(jnp.float32).T)
    b_pad = jnp.full((1, PADDED_CLASSES), -1e30, jnp.float32)
    b_pad = b_pad.at[0, :NUM_CLASSES].set(bias.astype(jnp.float32))

    grid = (pl.cdiv(B, tile_b),)               # ragged last block clipped by Pallas
    out = pl.pallas_call(
        _linear_softmax_kernel,
        out_shape=jax.ShapeDtypeStruct((B, NUM_CLASSES), jnp.float32),
        grid=grid,
        in_specs=[
            pl.BlockSpec((tile_b, IN_FEATURES), lambda i: (i, 0)),          # batch-tiled x
            pl.BlockSpec((IN_FEATURES, PADDED_CLASSES), lambda i: (0, 0)),  # resident W
            pl.BlockSpec((1, PADDED_CLASSES), lambda i: (0, 0)),            # resident b
        ],
        # Block last dim equals full array dim (10) -> legal; narrow masked stores
        # are fine since the kernel is HBM-read bound.
        out_specs=pl.BlockSpec((tile_b, NUM_CLASSES), lambda i: (i, 0)),
        compiler_params=pltpu.CompilerParams(
            dimension_semantics=("parallel",),   # megacore sharding on v7x
        ),
    )(x, w_rhs, b_pad)

    return out


if __name__ == "__main__":
    key = jax.random.PRNGKey(0)
    kx, kw, kb = jax.random.split(key, 3)

    # Small MNIST-like batch: (B, 1, 28, 28) -> forward reshapes to (B, 784)
    B = 8
    x = jax.random.normal(kx, (B, 1, 28, 28), dtype=jnp.float32)

    # Deterministic PyTorch-style Linear init: U(-1/sqrt(784), 1/sqrt(784))
    bound = 1.0 / jnp.sqrt(784.0)
    weight = jax.random.uniform(kw, (NUM_CLASSES, IN_FEATURES), jnp.float32, -bound, bound)
    bias = jax.random.uniform(kb, (NUM_CLASSES,), jnp.float32, -bound, bound)

    out = mnist_regression_forward(x, weight, bias)
    out = jax.block_until_ready(out)

    # Pure-JAX reference for correctness.
    x_flat = x.reshape(-1, IN_FEATURES)
    ref = jax.nn.softmax(x_flat @ weight.T + bias, axis=1)

    assert out.shape == (B, NUM_CLASSES)
    assert jnp.allclose(jnp.sum(out, axis=1), 1.0, atol=1e-4)   # exact normalization now
    assert jnp.allclose(out, ref, atol=1e-3, rtol=1e-3)

    print("KERNEL_OK")
</pallas_src>

<mosaic_0001>
module attributes {stable_mosaic.version = 11 : i64} {
  func.func @_linear_softmax_kernel(%arg0: i32, %arg1: memref<8x784xf32, #tpu.memory_space<vmem>>, %arg2: memref<784x128xf32, #tpu.memory_space<vmem>>, %arg3: memref<1x128xf32, #tpu.memory_space<vmem>>, %arg4: memref<8x10xf32, #tpu.memory_space<vmem>>) attributes {dimension_semantics = [#tpu.dimension_semantics<parallel>], iteration_bounds = array<i64: 1>, scalar_prefetch = 0 : i64, scratch_operands = 0 : i64, tpu.core_type = #tpu.core_type<tc>, window_params = [{transform_indices = @transform_0, window_bounds = array<i64: 8, 784>}, {pipeline_mode = #tpu.pipeline_mode<synchronous>, transform_indices = @transform_1, window_bounds = array<i64: 784, 128>}, {pipeline_mode = #tpu.pipeline_mode<synchronous>, transform_indices = @transform_2, window_bounds = array<i64: 1, 128>}, {transform_indices = @transform_3, window_bounds = array<i64: 8, 10>}]} {
    %c0 = arith.constant 0 : index
    %c0_0 = arith.constant 0 : index
    %0 = vector.load %arg1[%c0, %c0_0] : memref<8x784xf32, #tpu.memory_space<vmem>>, vector<8x784xf32>
    %c0_1 = arith.constant 0 : index
    %c0_2 = arith.constant 0 : index
    %1 = vector.load %arg2[%c0_1, %c0_2] : memref<784x128xf32, #tpu.memory_space<vmem>>, vector<784x128xf32>
    %cst = arith.constant dense<0.000000e+00> : vector<8x128xf32>
    %2 = tpu.matmul %0, %1, %cst {dimension_numbers = #tpu.dot_dimension_numbers<[1], [0], [0], [1], [0, 0, 1, 1], [], []>, precision = #tpu.contract_precision<fp32>} : vector<8x784xf32>, vector<784x128xf32>, vector<8x128xf32> -> vector<8x128xf32>
    %c0_3 = arith.constant 0 : index
    %c0_4 = arith.constant 0 : index
    %3 = vector.load %arg3[%c0_3, %c0_4] : memref<1x128xf32, #tpu.memory_space<vmem>>, vector<1x128xf32>
    %4 = vector.broadcast %3 : vector<1x128xf32> to vector<8x128xf32>
    %5 = arith.addf %2, %4 : vector<8x128xf32>
    %cst_5 = arith.constant dense<0xFF800000> : vector<8xf32>
    %6 = vector.multi_reduction <maximumf>, %5, %cst_5 [1] : vector<8x128xf32> to vector<8xf32>
    %7 = vector.shape_cast %6 : vector<8xf32> to vector<8x1xf32>
    %8 = vector.broadcast %7 : vector<8x1xf32> to vector<8x128xf32>
    %9 = arith.subf %5, %8 : vector<8x128xf32>
    %10 = math.exp %9 : vector<8x128xf32>
    %cst_6 = arith.constant dense<0.000000e+00> : vector<8xf32>
    %11 = vector.multi_reduction <add>, %10, %cst_6 [1] : vector<8x128xf32> to vector<8xf32>
    %12 = vector.shape_cast %11 : vector<8xf32> to vector<8x1xf32>
    %13 = vector.broadcast %12 : vector<8x1xf32> to vector<8x128xf32>
    %14 = arith.divf %10, %13 : vector<8x128xf32>
    %15 = vector.extract_strided_slice %14 {offsets = [0, 0], sizes = [8, 10], strides = [1, 1]} : vector<8x128xf32> to vector<8x10xf32>
    %c0_7 = arith.constant 0 : index
    %c0_8 = arith.constant 0 : index
    %16 = vector.load %arg4[%c0_7, %c0_8] : memref<8x10xf32, #tpu.memory_space<vmem>>, vector<8x10xf32>
    tpu.vector_store %arg4[%c0_7, %c0_8], %15 {strides = array<i32>} : memref<8x10xf32, #tpu.memory_space<vmem>>, vector<8x10xf32>,
    return
  }
  func.func @transform_0(%arg0: i32) -> (i32, i32) {
    %c0_i32 = arith.constant 0 : i32
    %c0_i32_0 = arith.constant 0 : i32
    return %arg0, %c0_i32 : i32, i32
  }
  func.func @transform_1(%arg0: i32) -> (i32, i32) {
    %c0_i32 = arith.constant 0 : i32
    %c0_i32_0 = arith.constant 0 : i32
    %c0_i32_1 = arith.constant 0 : i32
    return %c0_i32, %c0_i32_0 : i32, i32
  }
  func.func @transform_2(%arg0: i32) -> (i32, i32) {
    %c0_i32 = arith.constant 0 : i32
    %c0_i32_0 = arith.constant 0 : i32
    %c0_i32_1 = arith.constant 0 : i32
    return %c0_i32, %c0_i32_0 : i32, i32
  }
  func.func @transform_3(%arg0: i32) -> (i32, i32) {
    %c0_i32 = arith.constant 0 : i32
    %c0_i32_0 = arith.constant 0 : i32
    return %arg0, %c0_i32 : i32, i32
  }
}

</mosaic_0001>

<llo_original>
// kernel: tpu_custom_call.1
$region0: #{tpu_custom_call.1}
  #allocation0 [shape = 'u32[]', space=smem, size = 0x4, offset = 0x4, fixed_abs, tag = 'smem constant byte address 0x4 - core index']
  #allocation1 [shape = 'u32[144,128]{1,0:T(1,128)}', space=vmem, size = 0x12000, scoped, tag = 'internal scratch']
  %s0 = inlined_call_operand.hbm [shape: f32[8,784], index: 0, kind: input, shape index: {}]
  %s1 = inlined_call_operand.hbm [shape: f32[784,128], index: 1, kind: input, shape index: {}]
  %s2 = inlined_call_operand.vmem [shape: f32[1,128], index: 2, kind: input, shape index: {}]
  %s3 = inlined_call_operand.hbm [shape: f32[8,10], index: 3, kind: output, shape index: {}]
  %s4 = sld [smem:[#allocation0]]
  $region30: #{tpu_custom_call.1} parent=0
    _
  %s6 = ssub.s32 1, %s4
  %s7 = scalar_select 0, %s6, %s4
  $region1: #{tpu_custom_call.1} parent=0
    #allocation2 [shape = 'u8[28672]{0}', space=vmem, size = 0x7000, scoped, tag = 'input window, operand 0, single buffered']
    #allocation3 [shape = 's32[1]{0}', space=sflag, size = 0x4, scoped, tag = 'scoped memory for tpu_custom_call.1']
    #allocation4 [shape = 's32[1]{0}', space=sflag, size = 0x4, scoped, tag = 'scoped memory for tpu_custom_call.1']
    #allocation5 [shape = 'u8[401408]{0}', space=vmem, size = 0x62000, scoped, tag = 'input window, operand 1, single buffered']
    #allocation6 [shape = 's32[1]{0}', space=sflag, size = 0x4, scoped, tag = 'scoped memory for tpu_custom_call.1']
    #allocation7 [shape = 'u8[4096]{0}', space=vmem, size = 0x1000, scoped, tag = 'output window, operand 0, single buffered']
    %8 = vsyncpa [#allocation3], 0
    %9 = vsyncpa [#allocation6], 0
    %10 = vsyncpa [#allocation4], 0
    // Predicated region
    $region2: #{tpu_custom_call.1} parent=1 // pred_check
      _
    $region3: #{tpu_custom_call.1} parent=1 // pred_check_branch
      %12 = sbr.rel (0) target = $region5
    $region4: #{tpu_custom_call.1} parent=1 // pred_region
      %s14 = ssub.s32 896, 896
      %15 = vsyncadd [#allocation3], %s14
      %s17 = sshll.u32 [#allocation2], 4
      %s18 = int_to_ptr.vmem [resolvable:$true] %s17
      %20 = dma.hbm_to_vmem [thread:$0]  %s0, 896, %s18, [#allocation3]
    $region5: #{tpu_custom_call.1} parent=1 // pred_fallthru
      _
    // Predicated region
    $region6: #{tpu_custom_call.1} parent=1 // pred_check
      _
    $region7: #{tpu_custom_call.1} parent=1 // pred_check_branch
      %22 = sbr.rel (0) target = $region9
    $region8: #{tpu_custom_call.1} parent=1 // pred_region
      %s24 = ssub.s32 12544, 12544
      %25 = vsyncadd [#allocation6], %s24
      %s26 = sshll.u32 [#allocation5], 4
      %s27 = int_to_ptr.vmem [resolvable:$true] %s26
      %32 = dma.hbm_to_vmem [thread:$0]  %s1, 12544, %s27, [#allocation6], 128, 128, 8
    $region9: #{tpu_custom_call.1} parent=1 // pred_fallthru
      _
    // Predicated region
    $region10: #{tpu_custom_call.1} parent=1 // pred_check
      _
    $region11: #{tpu_custom_call.1} parent=1 // pred_check_branch
      %34 = sbr.rel (0) target = $region13
    $region12: #{tpu_custom_call.1} parent=1 // pred_region
      _
    $region13: #{tpu_custom_call.1} parent=1 // pred_fallthru
      _
    // Predicated region
    $region14: #{tpu_custom_call.1} parent=1 // pred_check
      _
    $region15: #{tpu_custom_call.1} parent=1 // pred_check_branch
      %36 = sbr.rel (0) target = $region17
    $region16: #{tpu_custom_call.1} parent=1 // pred_region
      %37 = dma.done [#allocation3], 896
    $region17: #{tpu_custom_call.1} parent=1 // pred_fallthru
      _
    // Predicated region
    $region18: #{tpu_custom_call.1} parent=1 // pred_check
      _
    $region19: #{tpu_custom_call.1} parent=1 // pred_check_branch
      %39 = sbr.rel (0) target = $region21
    $region20: #{tpu_custom_call.1} parent=1 // pred_region
      %40 = dma.done [#allocation6], 12544
    $region21: #{tpu_custom_call.1} parent=1 // pred_fallthru
      _
    %v41 = vld [vmem:[#allocation2] sm:$0xff]
    %v42 = vld [vmem:[#allocation2 + $0x8] sm:$0xff]
    %v43 = vld [vmem:[#allocation2 + $0x10] sm:$0xff]
    %v44 = vld [vmem:[#allocation2 + $0x18] sm:$0xff]
    %v45 = vld [vmem:[#allocation2 + $0x20] sm:$0xff]
    %v46 = vld [vmem:[#allocation2 + $0x28] sm:$0xff]
    %v47 = vld [vmem:[#allocation2 + $0x30] sm:$0xff]
    %v48 = vld [vmem:[#allocation5] sm:$0xff]
    %v49 = vld [vmem:[#allocation5 + $0x8] sm:$0xff]
    %v50 = vld [vmem:[#allocation5 + $0x10] sm:$0xff]
    %v51 = vld [vmem:[#allocation5 + $0x18] sm:$0xff]
    %v52 = vld [vmem:[#allocation5 + $0x20] sm:$0xff]
    %v53 = vld [vmem:[#allocation5 + $0x28] sm:$0xff]
    %v54 = vld [vmem:[#allocation5 + $0x30] sm:$0xff]
    %v55 = vld [vmem:[#allocation5 + $0x38] sm:$0xff]
    %v56 = vld [vmem:[#allocation5 + $0x40] sm:$0xff]
    %v57 = vld [vmem:[#allocation5 + $0x48] sm:$0xff]
    %v58 = vld [vmem:[#allocation5 + $0x50] sm:$0xff]
    %v59 = vld [vmem:[#allocation5 + $0x58] sm:$0xff]
    %v60 = vld [vmem:[#allocation5 + $0x60] sm:$0xff]
    %v61 = vld [vmem:[#allocation5 + $0x68] sm:$0xff]
    %v62 = vld [vmem:[#allocation5 + $0x70] sm:$0xff]
    %v63 = vld [vmem:[#allocation5 + $0x78] sm:$0xff]
    %v64 = vld [vmem:[#allocation5 + $0x80] sm:$0xff]
    %v65 = vld [vmem:[#allocation5 + $0x88] sm:$0xff]
    %v66 = vld [vmem:[#allocation5 + $0x90] sm:$0xff]
    %v67 = vld [vmem:[#allocation5 + $0x98] sm:$0xff]
    %v68 = vld [vmem:[#allocation5 + $0xa0] sm:$0xff]
    %v69 = vld [vmem:[#allocation5 + $0xa8] sm:$0xff]
    %v70 = vld [vmem:[#allocation5 + $0xb0] sm:$0xff]
    %v71 = vld [vmem:[#allocation5 + $0xb8] sm:$0xff]
    %v72 = vld [vmem:[#allocation5 + $0xc0] sm:$0xff]
    %v73 = vld [vmem:[#allocation5 + $0xc8] sm:$0xff]
    %v74 = vld [vmem:[#allocation5 + $0xd0] sm:$0xff]
    %v75 = vld [vmem:[#allocation5 + $0xd8] sm:$0xff]
    %v76 = vld [vmem:[#allocation5 + $0xe0] sm:$0xff]
    %v77 = vld [vmem:[#allocation5 + $0xe8] sm:$0xff]
    %v78 = vld [vmem:[#allocation5 + $0xf0] sm:$0xff]
    %v79 = vld [vmem:[#allocation5 + $0xf8] sm:$0xff]
    %v80 = vld [vmem:[#allocation5 + $0x100] sm:$0xff]
    %v81 = vld [vmem:[#allocation5 + $0x108] sm:$0xff]
    %v82 = vld [vmem:[#allocation5 + $0x110] sm:$0xff]
    %v83 = vld [vmem:[#allocation5 + $0x118] sm:$0xff]
    %v84 = vld [vmem:[#allocation5 + $0x120] sm:$0xff]
    %v85 = vld [vmem:[#allocation5 + $0x128] sm:$0xff]
    %v86 = vld [vmem:[#allocation5 + $0x130] sm:$0xff]
    %v87 = vld [vmem:[#allocation5 + $0x138] sm:$0xff]
    %v88 = vld [vmem:[#allocation5 + $0x140] sm:$0xff]
    %v89 = vld [vmem:[#allocation5 + $0x148] sm:$0xff]
    %v90 = vld [vmem:[#allocation5 + $0x150] sm:$0xff]
    %v91 = vld [vmem:[#allocation5 + $0x158] sm:$0xff]
    %v92 = vld [vmem:[#allocation5 + $0x160] sm:$0xff]
    %v93 = vld [vmem:[#allocation5 + $0x168] sm:$0xff]
    %v94 = vld [vmem:[#allocation5 + $0x170] sm:$0xff]
    %v95 = vld [vmem:[#allocation5 + $0x178] sm:$0xff]
    %v96 = vld [vmem:[#allocation5 + $0x180] sm:$0xff]
    %v97 = vld [vmem:[#allocation5 + $0x188] sm:$0xff]
    %v98 = vld [vmem:[#allocation5 + $0x190] sm:$0xff]
    %v99 = vld [vmem:[#allocation5 + $0x198] sm:$0xff]
    %v100 = vld [vmem:[#allocation5 + $0x1a0] sm:$0xff]
    %v101 = vld [vmem:[#allocation5 + $0x1a8] sm:$0xff]
    %v102 = vld [vmem:[#allocation5 + $0x1b0] sm:$0xff]
    %v103 = vld [vmem:[#allocation5 + $0x1b8] sm:$0xff]
    %v104 = vld [vmem:[#allocation5 + $0x1c0] sm:$0xff]
    %v105 = vld [vmem:[#allocation5 + $0x1c8] sm:$0xff]
    %v106 = vld [vmem:[#allocation5 + $0x1d0] sm:$0xff]
    %v107 = vld [vmem:[#allocation5 + $0x1d8] sm:$0xff]
    %v108 = vld [vmem:[#allocation5 + $0x1e0] sm:$0xff]
    %v109 = vld [vmem:[#allocation5 + $0x1e8] sm:$0xff]
    %v110 = vld [vmem:[#allocation5 + $0x1f0] sm:$0xff]
    %v111 = vld [vmem:[#allocation5 + $0x1f8] sm:$0xff]
    %v112 = vld [vmem:[#allocation5 + $0x200] sm:$0xff]
    %v113 = vld [vmem:[#allocation5 + $0x208] sm:$0xff]
    %v114 = vld [vmem:[#allocation5 + $0x210] sm:$0xff]
    %v115 = vld [vmem:[#allocation5 + $0x218] sm:$0xff]
    %v116 = vld [vmem:[#allocation5 + $0x220] sm:$0xff]
    %v117 = vld [vmem:[#allocation5 + $0x228] sm:$0xff]
    %v118 = vld [vmem:[#allocation5 + $0x230] sm:$0xff]
    %v119 = vld [vmem:[#allocation5 + $0x238] sm:$0xff]
    %v120 = vld [vmem:[#allocation5 + $0x240] sm:$0xff]
    %v121 = vld [vmem:[#allocation5 + $0x248] sm:$0xff]
    %v122 = vld [vmem:[#allocation5 + $0x250] sm:$0xff]
    %v123 = vld [vmem:[#allocation5 + $0x258] sm:$0xff]
    %v124 = vld [vmem:[#allocation5 + $0x260] sm:$0xff]
    %v125 = vld [vmem:[#allocation5 + $0x268] sm:$0xff]
    %v126 = vld [vmem:[#allocation5 + $0x270] sm:$0xff]
    %v127 = vld [vmem:[#allocation5 + $0x278] sm:$0xff]
    %v128 = vld [vmem:[#allocation5 + $0x280] sm:$0xff]
    %v129 = vld [vmem:[#allocation5 + $0x288] sm:$0xff]
    %v130 = vld [vmem:[#allocation5 + $0x290] sm:$0xff]
    %v131 = vld [vmem:[#allocation5 + $0x298] sm:$0xff]
    %v132 = vld [vmem:[#allocation5 + $0x2a0] sm:$0xff]
    %v133 = vld [vmem:[#allocation5 + $0x2a8] sm:$0xff]
    %v134 = vld [vmem:[#allocation5 + $0x2b0] sm:$0xff]
    %v135 = vld [vmem:[#allocation5 + $0x2b8] sm:$0xff]
    %v136 = vld [vmem:[#allocation5 + $0x2c0] sm:$0xff]
    %v137 = vld [vmem:[#allocation5 + $0x2c8] sm:$0xff]
    %v138 = vld [vmem:[#allocation5 + $0x2d0] sm:$0xff]
    %v139 = vld [vmem:[#allocation5 + $0x2d8] sm:$0xff]
    %v140 = vld [vmem:[#allocation5 + $0x2e0] sm:$0xff]
    %v141 = vld [vmem:[#allocation5 + $0x2e8] sm:$0xff]
    %v142 = vld [vmem:[#allocation5 + $0x2f0] sm:$0xff]
    %v143 = vld [vmem:[#allocation5 + $0x2f8] sm:$0xff]
    %v144 = vld [vmem:[#allocation5 + $0x300] sm:$0xff]
    %v145 = vld [vmem:[#allocation5 + $0x308] sm:$0xff]
    %v146 = vld [vmem:[%s2] sm:$0x1]
    %v148 = vlaneseq
    %v149 = vshrl.u32 %v148, 7
    %v150 = vsub.s32 0, %v149
    %v151 = vrot.slane %v146, %v150
    %vm153 = vcmask 130048
    %v155 = vsel %vm153, %v47, 0
    %157 = vmatprep.subr.mxu0 0.0
    %v158 = vand.u32 %v48, 4294901760
    %159 = vmatpush1.msra.mxu0 %v158
    %160 = vmatprep.subr.mxu0 0.0
    %v161 = vand.u32 %v49, 4294901760
    %162 = vmatpush1.msra.mxu0 %v161
    %163 = vmatprep.subr.mxu0 0.0
    %v164 = vand.u32 %v50, 4294901760
    %165 = vmatpush1.msra.mxu0 %v164
    %166 = vmatprep.subr.mxu0 0.0
    %v167 = vand.u32 %v51, 4294901760
    %168 = vmatpush1.msra.mxu0 %v167
    %169 = vmatprep.subr.mxu0 0.0
    %v170 = vand.u32 %v52, 4294901760
    %171 = vmatpush1.msra.mxu0 %v170
    %172 = vmatprep.subr.mxu0 0.0
    %v173 = vand.u32 %v53, 4294901760
    %174 = vmatpush1.msra.mxu0 %v173
    %175 = vmatprep.subr.mxu0 0.0
    %v176 = vand.u32 %v54, 4294901760
    %177 = vmatpush1.msra.mxu0 %v176
    %178 = vmatprep.subr.mxu0 0.0
    %v179 = vand.u32 %v55, 4294901760
    %180 = vmatpush1.msra.mxu0 %v179
    %181 = vmatprep.subr.mxu0 0.0
    %v182 = vand.u32 %v56, 4294901760
    %183 = vmatpush1.msra.mxu0 %v182
    %184 = vmatprep.subr.mxu0 0.0
    %v185 = vand.u32 %v57, 4294901760
    %186 = vmatpush1.msra.mxu0 %v185
    %187 = vmatprep.subr.mxu0 0.0
    %v188 = vand.u32 %v58, 4294901760
    %189 = vmatpush1.msra.mxu0 %v188
    %190 = vmatprep.subr.mxu0 0.0
    %v191 = vand.u32 %v59, 4294901760
    %192 = vmatpush1.msra.mxu0 %v191
    %193 = vmatprep.subr.mxu0 0.0
    %v194 = vand.u32 %v60, 4294901760
    %195 = vmatpush1.msra.mxu0 %v194
    %196 = vmatprep.subr.mxu0 0.0
    %v197 = vand.u32 %v61, 4294901760
    %198 = vmatpush1.msra.mxu0 %v197
    %199 = vmatprep.subr.mxu0 0.0
    %v200 = vand.u32 %v62, 4294901760
    %201 = vmatpush1.msra.mxu0 %v200
    %202 = vmatprep.subr.mxu0 0.0
    %v203 = vand.u32 %v63, 4294901760
    %204 = vmatpush1.msra.mxu0 %v203
    %205 = vmatprep.subr.mxu0 0.0
    %v206 = vand.u32 %v64, 4294901760
    %207 = vmatpush1.msra.mxu0 %v206
    %208 = vmatprep.subr.mxu0 0.0
    %v209 = vand.u32 %v65, 4294901760
    %210 = vmatpush1.msra.mxu0 %v209
    %211 = vmatprep.subr.mxu0 0.0
    %v212 = vand.u32 %v66, 4294901760
    %213 = vmatpush1.msra.mxu0 %v212
    %214 = vmatprep.subr.mxu0 0.0
    %v215 = vand.u32 %v67, 4294901760
    %216 = vmatpush1.msra.mxu0 %v215
    %217 = vmatprep.subr.mxu0 0.0
    %v218 = vand.u32 %v68, 4294901760
    %219 = vmatpush1.msra.mxu0 %v218
    %220 = vmatprep.subr.mxu0 0.0
    %v221 = vand.u32 %v69, 4294901760
    %222 = vmatpush1.msra.mxu0 %v221
    %223 = vmatprep.subr.mxu0 0.0
    %v224 = vand.u32 %v70, 4294901760
    %225 = vmatpush1.msra.mxu0 %v224
    %226 = vmatprep.subr.mxu0 0.0
    %v227 = vand.u32 %v71, 4294901760
    %228 = vmatpush1.msra.mxu0 %v227
    %229 = vmatprep.subr.mxu0 0.0
    %v230 = vand.u32 %v72, 4294901760
    %231 = vmatpush1.msra.mxu0 %v230
    %232 = vmatprep.subr.mxu0 0.0
    %v233 = vand.u32 %v73, 4294901760
    %234 = vmatpush1.msra.mxu0 %v233
    %235 = vmatprep.subr.mxu0 0.0
    %v236 = vand.u32 %v74, 4294901760
    %237 = vmatpush1.msra.mxu0 %v236
    %238 = vmatprep.subr.mxu0 0.0
    %v239 = vand.u32 %v75, 4294901760
    %240 = vmatpush1.msra.mxu0 %v239
    %241 = vmatprep.subr.mxu0 0.0
    %v242 = vand.u32 %v76, 4294901760
    %243 = vmatpush1.msra.mxu0 %v242
    %244 = vmatprep.subr.mxu0 0.0
    %v245 = vand.u32 %v77, 4294901760
    %246 = vmatpush1.msra.mxu0 %v245
    %247 = vmatprep.subr.mxu0 0.0
    %v248 = vand.u32 %v78, 4294901760
    %249 = vmatpush1.msra.mxu0 %v248
    %250 = vmatprep.subr.mxu0 0.0
    %v251 = vand.u32 %v79, 4294901760
    %252 = vmatpush1.msra.mxu0 %v251
    %v253 = vand.u32 %v42, 4294901760
    %v254 = vsub.f32 %v42, %v253
    %v255 = vand.u32 %v254, 4294901760
    %v256 = vsub.f32 %v254, %v255
    %v257 = vand.u32 %v256, 4294901760
    %258 = vmatprep.mubr.f32.mxu0 %v257
    %v259 = vand.u32 %v41, 4294901760
    %v260 = vsub.f32 %v41, %v259
    %v261 = vand.u32 %v260, 4294901760
    %v262 = vsub.f32 %v260, %v261
    %v263 = vand.u32 %v262, 4294901760
    %264 = vmatmul.mubr.f32.gmra.mrb[0].mxu0 %v263
    %v265 = vpop.f32.mrb[0].mxu0
    %v266 = vadd.f32 %v151, %v265
    %v267 = vpop.f32.mrb[0].mxu0
    %268 = vdwg.mxu0
    %269 = vmatprep.subr.mxu0 0.0
    %v270 = vand.u32 %v48, 4294901760
    %v271 = vsub.f32 %v48, %v270
    %v272 = vand.u32 %v271, 4294901760
    %v273 = vsub.f32 %v271, %v272
    %v274 = vand.u32 %v273, 4294901760
    %275 = vmatpush1.msra.mxu0 %v274
    %276 = vmatprep.subr.mxu0 0.0
    %v277 = vand.u32 %v49, 4294901760
    %v278 = vsub.f32 %v49, %v277
    %v279 = vand.u32 %v278, 4294901760
    %v280 = vsub.f32 %v278, %v279
    %v281 = vand.u32 %v280, 4294901760
    %282 = vmatpush1.msra.mxu0 %v281
    %283 = vmatprep.subr.mxu0 0.0
    %v284 = vand.u32 %v50, 4294901760
    %v285 = vsub.f32 %v50, %v284
    %v286 = vand.u32 %v285, 4294901760
    %v287 = vsub.f32 %v285, %v286
    %v288 = vand.u32 %v287, 4294901760
    %289 = vmatpush1.msra.mxu0 %v288
    %290 = vmatprep.subr.mxu0 0.0
    %v291 = vand.u32 %v51, 4294901760
    %v292 = vsub.f32 %v51, %v291
    %v293 = vand.u32 %v292, 4294901760
    %v294 = vsub.f32 %v292, %v293
    %v295 = vand.u32 %v294, 4294901760
    %296 = vmatpush1.msra.mxu0 %v295
    %297 = vmatprep.subr.mxu0 0.0
    %v298 = vand.u32 %v52, 4294901760
    %v299 = vsub.f32 %v52, %v298
    %v300 = vand.u32 %v299, 4294901760
    %v301 = vsub.f32 %v299, %v300
    %v302 = vand.u32 %v301, 4294901760
    %303 = vmatpush1.msra.mxu0 %v302
    %304 = vmatprep.subr.mxu0 0.0
    %v305 = vand.u32 %v53, 4294901760
    %v306 = vsub.f32 %v53, %v305
    %v307 = vand.u32 %v306, 4294901760
    %v308 = vsub.f32 %v306, %v307
    %v309 = vand.u32 %v308, 4294901760
    %310 = vmatpush1.msra.mxu0 %v309
    %311 = vmatprep.subr.mxu0 0.0
    %v312 = vand.u32 %v54, 4294901760
    %v313 = vsub.f32 %v54, %v312
    %v314 = vand.u32 %v313, 4294901760
    %v315 = vsub.f32 %v313, %v314
    %v316 = vand.u32 %v315, 4294901760
    %317 = vmatpush1.msra.mxu0 %v316
    %318 = vmatprep.subr.mxu0 0.0
    %v319 = vand.u32 %v55, 4294901760
    %v320 = vsub.f32 %v55, %v319
    %v321 = vand.u32 %v320, 4294901760
    %v322 = vsub.f32 %v320, %v321
    %v323 = vand.u32 %v322, 4294901760
    %324 = vmatpush1.msra.mxu0 %v323
    %325 = vmatprep.subr.mxu0 0.0
    %v326 = vand.u32 %v56, 4294901760
    %v327 = vsub.f32 %v56, %v326
    %v328 = vand.u32 %v327, 4294901760
    %v329 = vsub.f32 %v327, %v328
    %v330 = vand.u32 %v329, 4294901760
    %331 = vmatpush1.msra.mxu0 %v330
    %332 = vmatprep.subr.mxu0 0.0
    %v333 = vand.u32 %v57, 4294901760
    %v334 = vsub.f32 %v57, %v333
    %v335 = vand.u32 %v334, 4294901760
    %v336 = vsub.f32 %v334, %v335
    %v337 = vand.u32 %v336, 4294901760
    %338 = vmatpush1.msra.mxu0 %v337
    %339 = vmatprep.subr.mxu0 0.0
    %v340 = vand.u32 %v58, 4294901760
    %v341 = vsub.f32 %v58, %v340
    %v342 = vand.u32 %v341, 4294901760
    %v343 = vsub.f32 %v341, %v342
    %v344 = vand.u32 %v343, 4294901760
    %345 = vmatpush1.msra.mxu0 %v344
    %346 = vmatprep.subr.mxu0 0.0
    %v347 = vand.u32 %v59, 4294901760
    %v348 = vsub.f32 %v59, %v347
    %v349 = vand.u32 %v348, 4294901760
    %v350 = vsub.f32 %v348, %v349
    %v351 = vand.u32 %v350, 4294901760
    %352 = vmatpush1.msra.mxu0 %v351
    %353 = vmatprep.subr.mxu0 0.0
    %v354 = vand.u32 %v60, 4294901760
    %v355 = vsub.f32 %v60, %v354
    %v356 = vand.u32 %v355, 4294901760
    %v357 = vsub.f32 %v355, %v356
    %v358 = vand.u32 %v357, 4294901760
    %359 = vmatpush1.msra.mxu0 %v358
    %360 = vmatprep.subr.mxu0 0.0
    %v361 = vand.u32 %v61, 4294901760
    %v362 = vsub.f32 %v61, %v361
    %v363 = vand.u32 %v362, 4294901760
    %v364 = vsub.f32 %v362, %v363
    %v365 = vand.u32 %v364, 4294901760
    %366 = vmatpush1.msra.mxu0 %v365
    %367 = vmatprep.subr.mxu0 0.0
    %v368 = vand.u32 %v62, 4294901760
    %v369 = vsub.f32 %v62, %v368
    %v370 = vand.u32 %v369, 4294901760
    %v371 = vsub.f32 %v369, %v370
    %v372 = vand.u32 %v371, 4294901760
    %373 = vmatpush1.msra.mxu0 %v372
    %374 = vmatprep.subr.mxu0 0.0
    %v375 = vand.u32 %v63, 4294901760
    %v376 = vsub.f32 %v63, %v375
    %v377 = vand.u32 %v376, 4294901760
    %v378 = vsub.f32 %v376, %v377
    %v379 = vand.u32 %v378, 4294901760
    %380 = vmatpush1.msra.mxu0 %v379
    %381 = vmatprep.subr.mxu0 0.0
    %v382 = vand.u32 %v64, 4294901760
    %v383 = vsub.f32 %v64, %v382
    %v384 = vand.u32 %v383, 4294901760
    %v385 = vsub.f32 %v383, %v384
    %v386 = vand.u32 %v385, 4294901760
    %387 = vmatpush1.msra.mxu0 %v386
    %388 = vmatprep.subr.mxu0 0.0
    %v389 = vand.u32 %v65, 4294901760
    %v390 = vsub.f32 %v65, %v389
    %v391 = vand.u32 %v390, 4294901760
    %v392 = vsub.f32 %v390, %v391
    %v393 = vand.u32 %v392, 4294901760
    %394 = vmatpush1.msra.mxu0 %v393
    %395 = vmatprep.subr.mxu0 0.0
    %v396 = vand.u32 %v66, 4294901760
    %v397 = vsub.f32 %v66, %v396
    %v398 = vand.u32 %v397, 4294901760
    %v399 = vsub.f32 %v397, %v398
    %v400 = vand.u32 %v399, 4294901760
    %401 = vmatpush1.msra.mxu0 %v400
    %402 = vmatprep.subr.mxu0 0.0
    %v403 = vand.u32 %v67, 4294901760
    %v404 = vsub.f32 %v67, %v403
    %v405 = vand.u32 %v404, 4294901760
    %v406 = vsub.f32 %v404, %v405
    %v407 = vand.u32 %v406, 4294901760
    %408 = vmatpush1.msra.mxu0 %v407
    %409 = vmatprep.subr.mxu0 0.0
    %v410 = vand.u32 %v68, 4294901760
    %v411 = vsub.f32 %v68, %v410
    %v412 = vand.u32 %v411, 4294901760
    %v413 = vsub.f32 %v411, %v412
    %v414 = vand.u32 %v413, 4294901760
    %415 = vmatpush1.msra.mxu0 %v414
    %416 = vmatprep.subr.mxu0 0.0
    %v417 = vand.u32 %v69, 4294901760
    %v418 = vsub.f32 %v69, %v417
    %v419 = vand.u32 %v418, 4294901760
    %v420 = vsub.f32 %v418, %v419
    %v421 = vand.u32 %v420, 4294901760
    %422 = vmatpush1.msra.mxu0 %v421
    %423 = vmatprep.subr.mxu0 0.0
    %v424 = vand.u32 %v70, 4294901760
    %v425 = vsub.f32 %v70, %v424
    %v426 = vand.u32 %v425, 4294901760
    %v427 = vsub.f32 %v425, %v426
    %v428 = vand.u32 %v427, 4294901760
    %429 = vmatpush1.msra.mxu0 %v428
    %430 = vmatprep.subr.mxu0 0.0
    %v431 = vand.u32 %v71, 4294901760
    %v432 = vsub.f32 %v71, %v431
    %v433 = vand.u32 %v432, 4294901760
    %v434 = vsub.f32 %v432, %v433
    %v435 = vand.u32 %v434, 4294901760
    %436 = vmatpush1.msra.mxu0 %v435
    %437 = vmatprep.subr.mxu0 0.0
    %v438 = vand.u32 %v72, 4294901760
    %v439 = vsub.f32 %v72, %v438
    %v440 = vand.u32 %v439, 4294901760
    %v441 = vsub.f32 %v439, %v440
    %v442 = vand.u32 %v441, 4294901760
    %443 = vmatpush1.msra.mxu0 %v442
    %444 = vmatprep.subr.mxu0 0.0
    %v445 = vand.u32 %v73, 4294901760
    %v446 = vsub.f32 %v73, %v445
    %v447 = vand.u32 %v446, 4294901760
    %v448 = vsub.f32 %v446, %v447
    %v449 = vand.u32 %v448, 4294901760
    %450 = vmatpush1.msra.mxu0 %v449
    %451 = vmatprep.subr.mxu0 0.0
    %v452 = vand.u32 %v74, 4294901760
    %v453 = vsub.f32 %v74, %v452
    %v454 = vand.u32 %v453, 4294901760
    %v455 = vsub.f32 %v453, %v454
    %v456 = vand.u32 %v455, 4294901760
    %457 = vmatpush1.msra.mxu0 %v456
    %458 = vmatprep.subr.mxu0 0.0
    %v459 = vand.u32 %v75, 4294901760
    %v460 = vsub.f32 %v75, %v459
    %v461 = vand.u32 %v460, 4294901760
    %v462 = vsub.f32 %v460, %v461
    %v463 = vand.u32 %v462, 4294901760
    %464 = vmatpush1.msra.mxu0 %v463
    %465 = vmatprep.subr.mxu0 0.0
    %v466 = vand.u32 %v76, 4294901760
    %v467 = vsub.f32 %v76, %v466
    %v468 = vand.u32 %v467, 4294901760
    %v469 = vsub.f32 %v467, %v468
    %v470 = vand.u32 %v469, 4294901760
    %471 = vmatpush1.msra.mxu0 %v470
    %472 = vmatprep.subr.mxu0 0.0
    %v473 = vand.u32 %v77, 4294901760
    %v474 = vsub.f32 %v77, %v473
    %v475 = vand.u32 %v474, 4294901760
    %v476 = vsub.f32 %v474, %v475
    %v477 = vand.u32 %v476, 4294901760
    %478 = vmatpush1.msra.mxu0 %v477
    %479 = vmatprep.subr.mxu0 0.0
    %v480 = vand.u32 %v78, 4294901760
    %v481 = vsub.f32 %v78, %v480
    %v482 = vand.u32 %v481, 4294901760
    %v483 = vsub.f32 %v481, %v482
    %v484 = vand.u32 %v483, 4294901760
    %485 = vmatpush1.msra.mxu0 %v484
    %486 = vmatprep.subr.mxu0 0.0
    %v487 = vand.u32 %v79, 4294901760
    %v488 = vsub.f32 %v79, %v487
    %v489 = vand.u32 %v488, 4294901760
    %v490 = vsub.f32 %v488, %v489
    %v491 = vand.u32 %v490, 4294901760
    %492 = vmatpush1.msra.mxu0 %v491
    %v493 = vand.u32 %v42, 4294901760
    %494 = vmatprep.mubr.f32.mxu0 %v493
    %v495 = vand.u32 %v41, 4294901760
    %496 = vmatmul.mubr.f32.gmra.mrb[0].mxu0 %v495
    %v497 = vpop.f32.mrb[0].mxu0
    %v498 = vadd.f32 %v266, %v497
    %v499 = vpop.f32.mrb[0].mxu0
    %500 = vdwg.mxu0
    %501 = vmatprep.subr.mxu0 0.0
    %v502 = vand.u32 %v48, 4294901760
    %v503 = vsub.f32 %v48, %v502
    %504 = vmatpush1.msra.mxu0 %v503
    %505 = vmatprep.subr.mxu0 0.0
    %v506 = vand.u32 %v49, 4294901760
    %v507 = vsub.f32 %v49, %v506
    %508 = vmatpush1.msra.mxu0 %v507
    %509 = vmatprep.subr.mxu0 0.0
    %v510 = vand.u32 %v50, 4294901760
    %v511 = vsub.f32 %v50, %v510
    %512 = vmatpush1.msra.mxu0 %v511
    %513 = vmatprep.subr.mxu0 0.0
    %v514 = vand.u32 %v51, 4294901760
    %v515 = vsub.f32 %v51, %v514
    %516 = vmatpush1.msra.mxu0 %v515
    %517 = vmatprep.subr.mxu0 0.0
    %v518 = vand.u32 %v52, 4294901760
    %v519 = vsub.f32 %v52, %v518
    %520 = vmatpush1.msra.mxu0 %v519
    %521 = vmatprep.subr.mxu0 0.0
    %v522 = vand.u32 %v53, 4294901760
    %v523 = vsub.f32 %v53, %v522
    %524 = vmatpush1.msra.mxu0 %v523
    %525 = vmatprep.subr.mxu0 0.0
    %v526 = vand.u32 %v54, 4294901760
    %v527 = vsub.f32 %v54, %v526
    %528 = vmatpush1.msra.mxu0 %v527
    %529 = vmatprep.subr.mxu0 0.0
    %v530 = vand.u32 %v55, 4294901760
    %v531 = vsub.f32 %v55, %v530
    %532 = vmatpush1.msra.mxu0 %v531
    %533 = vmatprep.subr.mxu0 0.0
    %v534 = vand.u32 %v56, 4294901760
    %v535 = vsub.f32 %v56, %v534
    %536 = vmatpush1.msra.mxu0 %v535
    %537 = vmatprep.subr.mxu0 0.0
    %v538 = vand.u32 %v57, 4294901760
    %v539 = vsub.f32 %v57, %v538
    %540 = vmatpush1.msra.mxu0 %v539
    %541 = vmatprep.subr.mxu0 0.0
    %v542 = vand.u32 %v58, 4294901760
    %v543 = vsub.f32 %v58, %v542
    %544 = vmatpush1.msra.mxu0 %v543
    %545 = vmatprep.subr.mxu0 0.0
    %v546 = vand.u32 %v59, 4294901760
    %v547 = vsub.f32 %v59, %v546
    %548 = vmatpush1.msra.mxu0 %v547
    %549 = vmatprep.subr.mxu0 0.0
    %v550 = vand.u32 %v60, 4294901760
    %v551 = vsub.f32 %v60, %v550
    %552 = vmatpush1.msra.mxu0 %v551
    %553 = vmatprep.subr.mxu0 0.0
    %v554 = vand.u32 %v61, 4294901760
    %v555 = vsub.f32 %v61, %v554
    %556 = vmatpush1.msra.mxu0 %v555
    %557 = vmatprep.subr.mxu0 0.0
    %v558 = vand.u32 %v62, 4294901760
    %v559 = vsub.f32 %v62, %v558
    %560 = vmatpush1.msra.mxu0 %v559
    %561 = vmatprep.subr.mxu0 0.0
    %v562 = vand.u32 %v63, 4294901760
    %v563 = vsub.f32 %v63, %v562
    %564 = vmatpush1.msra.mxu0 %v563
    %565 = vmatprep.subr.mxu0 0.0
    %v566 = vand.u32 %v64, 4294901760
    %v567 = vsub.f32 %v64, %v566
    %568 = vmatpush1.msra.mxu0 %v567
    %569 = vmatprep.subr.mxu0 0.0
    %v570 = vand.u32 %v65, 4294901760
    %v571 = vsub.f32 %v65, %v570
    %572 = vmatpush1.msra.mxu0 %v571
    %573 = vmatprep.subr.mxu0 0.0
    %v574 = vand.u32 %v66, 4294901760
    %v575 = vsub.f32 %v66, %v574
    %576 = vmatpush1.msra.mxu0 %v575
    %577 = vmatprep.subr.mxu0 0.0
    %v578 = vand.u32 %v67, 4294901760
    %v579 = vsub.f32 %v67, %v578
    %580 = vmatpush1.msra.mxu0 %v579
    %581 = vmatprep.subr.mxu0 0.0
    %v582 = vand.u32 %v68, 4294901760
    %v583 = vsub.f32 %v68, %v582
    %584 = vmatpush1.msra.mxu0 %v583
    %585 = vmatprep.subr.mxu0 0.0
    %v586 = vand.u32 %v69, 4294901760
    %v587 = vsub.f32 %v69, %v586
    %588 = vmatpush1.msra.mxu0 %v587
    %589 = vmatprep.subr.mxu0 0.0
    %v590 = vand.u32 %v70, 4294901760
    %v591 = vsub.f32 %v70, %v590
    %592 = vmatpush1.msra.mxu0 %v591
    %593 = vmatprep.subr.mxu0 0.0
    %v594 = vand.u32 %v71, 4294901760
    %v595 = vsub.f32 %v71, %v594
    %596 = vmatpush1.msra.mxu0 %v595
    %597 = vmatprep.subr.mxu0 0.0
    %v598 = vand.u32 %v72, 4294901760
    %v599 = vsub.f32 %v72, %v598
    %600 = vmatpush1.msra.mxu0 %v599
    %601 = vmatprep.subr.mxu0 0.0
    %v602 = vand.u32 %v73, 4294901760
    %v603 = vsub.f32 %v73, %v602
    %604 = vmatpush1.msra.mxu0 %v603
    %605 = vmatprep.subr.mxu0 0.0
    %v606 = vand.u32 %v74, 4294901760
    %v607 = vsub.f32 %v74, %v606
    %608 = vmatpush1.msra.mxu0 %v607
    %609 = vmatprep.subr.mxu0 0.0
    %v610 = vand.u32 %v75, 4294901760
    %v611 = vsub.f32 %v75, %v610
    %612 = vmatpush1.msra.mxu0 %v611
    %613 = vmatprep.subr.mxu0 0.0
    %v614 = vand.u32 %v76, 4294901760
    %v615 = vsub.f32 %v76, %v614
    %616 = vmatpush1.msra.mxu0 %v615
    %617 = vmatprep.subr.mxu0 0.0
    %v618 = vand.u32 %v77, 4294901760
    %v619 = vsub.f32 %v77, %v618
    %620 = vmatpush1.msra.mxu0 %v619
    %621 = vmatprep.subr.mxu0 0.0
    %v622 = vand.u32 %v78, 4294901760
    %v623 = vsub.f32 %v78, %v622
    %624 = vmatpush1.msra.mxu0 %v623
    %625 = vmatprep.subr.mxu0 0.0
    %v626 = vand.u32 %v79, 4294901760
    %v627 = vsub.f32 %v79, %v626
    %628 = vmatpush1.msra.mxu0 %v627
    %v629 = vand.u32 %v42, 4294901760
    %v630 = vsub.f32 %v42, %v629
    %631 = vmatprep.mubr.f32.mxu0 %v630
    %v632 = vand.u32 %v41, 4294901760
    %v633 = vsub.f32 %v41, %v632
    %634 = vmatmul.mubr.f32.gmra.mrb[0].mxu0 %v633
    %v635 = vpop.f32.mrb[0].mxu0
    %v636 = vadd.f32 %v498, %v635
    %v637 = vpop.f32.mrb[0].mxu0
    %638 = vdwg.mxu0
    %639 = vmatprep.subr.mxu0 0.0
    %v640 = vand.u32 %v48, 4294901760
    %641 = vmatpush1.msra.mxu0 %v640
    %642 = vmatprep.subr.mxu0 0.0
    %v643 = vand.u32 %v49, 4294901760
    %644 = vmatpush1.msra.mxu0 %v643
    %645 = vmatprep.subr.mxu0 0.0
    %v646 = vand.u32 %v50, 4294901760
    %647 = vmatpush1.msra.mxu0 %v646
    %648 = vmatprep.subr.mxu0 0.0
    %v649 = vand.u32 %v51, 4294901760
    %650 = vmatpush1.msra.mxu0 %v649
    %651 = vmatprep.subr.mxu0 0.0
    %v652 = vand.u32 %v52, 4294901760
    %653 = vmatpush1.msra.mxu0 %v652
    %654 = vmatprep.subr.mxu0 0.0
    %v655 = vand.u32 %v53, 4294901760
    %656 = vmatpush1.msra.mxu0 %v655
    %657 = vmatprep.subr.mxu0 0.0
    %v658 = vand.u32 %v54, 4294901760
    %659 = vmatpush1.msra.mxu0 %v658
    %660 = vmatprep.subr.mxu0 0.0
    %v661 = vand.u32 %v55, 4294901760
    %662 = vmatpush1.msra.mxu0 %v661
    %663 = vmatprep.subr.mxu0 0.0
    %v664 = vand.u32 %v56, 4294901760
    %665 = vmatpush1.msra.mxu0 %v664
    %666 = vmatprep.subr.mxu0 0.0
    %v667 = vand.u32 %v57, 4294901760
    %668 = vmatpush1.msra.mxu0 %v667
    %669 = vmatprep.subr.mxu0 0.0
    %v670 = vand.u32 %v58, 4294901760
    %671 = vmatpush1.msra.mxu0 %v670
    %672 = vmatprep.subr.mxu0 0.0
    %v673 = vand.u32 %v59, 4294901760
    %674 = vmatpush1.msra.mxu0 %v673
    %675 = vmatprep.subr.mxu0 0.0
    %v676 = vand.u32 %v60, 4294901760
    %677 = vmatpush1.msra.mxu0 %v676
    %678 = vmatprep.subr.mxu0 0.0
    %v679 = vand.u32 %v61, 4294901760
    %680 = vmatpush1.msra.mxu0 %v679
    %681 = vmatprep.subr.mxu0 0.0
    %v682 = vand.u32 %v62, 4294901760
    %683 = vmatpush1.msra.mxu0 %v682
    %684 = vmatprep.subr.mxu0 0.0
    %v685 = vand.u32 %v63, 4294901760
    %686 = vmatpush1.msra.mxu0 %v685
    %687 = vmatprep.subr.mxu0 0.0
    %v688 = vand.u32 %v64, 4294901760
    %689 = vmatpush1.msra.mxu0 %v688
    %690 = vmatprep.subr.mxu0 0.0
    %v691 = vand.u32 %v65, 4294901760
    %692 = vmatpush1.msra.mxu0 %v691
    %693 = vmatprep.subr.mxu0 0.0
    %v694 = vand.u32 %v66, 4294901760
    %695 = vmatpush1.msra.mxu0 %v694
    %696 = vmatprep.subr.mxu0 0.0
    %v697 = vand.u32 %v67, 4294901760
    %698 = vmatpush1.msra.mxu0 %v697
    %699 = vmatprep.subr.mxu0 0.0
    %v700 = vand.u32 %v68, 4294901760
    %701 = vmatpush1.msra.mxu0 %v700
    %702 = vmatprep.subr.mxu0 0.0
    %v703 = vand.u32 %v69, 4294901760
    %704 = vmatpush1.msra.mxu0 %v703
    %705 = vmatprep.subr.mxu0 0.0
    %v706 = vand.u32 %v70, 4294901760
    %707 = vmatpush1.msra.mxu0 %v706
    %708 = vmatprep.subr.mxu0 0.0
    %v709 = vand.u32 %v71, 4294901760
    %710 = vmatpush1.msra.mxu0 %v709
    %711 = vmatprep.subr.mxu0 0.0
    %v712 = vand.u32 %v72, 4294901760
    %713 = vmatpush1.msra.mxu0 %v712
    %714 = vmatprep.subr.mxu0 0.0
    %v715 = vand.u32 %v73, 4294901760
    %716 = vmatpush1.msra.mxu0 %v715
    %717 = vmatprep.subr.mxu0 0.0
    %v718 = vand.u32 %v74, 4294901760
    %719 = vmatpush1.msra.mxu0 %v718
    %720 = vmatprep.subr.mxu0 0.0
    %v721 = vand.u32 %v75, 4294901760
    %722 = vmatpush1.msra.mxu0 %v721
    %723 = vmatprep.subr.mxu0 0.0
    %v724 = vand.u32 %v76, 4294901760
    %725 = vmatpush1.msra.mxu0 %v724
    %726 = vmatprep.subr.mxu0 0.0
    %v727 = vand.u32 %v77, 4294901760
    %728 = vmatpush1.msra.mxu0 %v727
    %729 = vmatprep.subr.mxu0 0.0
    %v730 = vand.u32 %v78, 4294901760
    %731 = vmatpush1.msra.mxu0 %v730
    %732 = vmatprep.subr.mxu0 0.0
    %v733 = vand.u32 %v79, 4294901760
    %734 = vmatpush1.msra.mxu0 %v733
    %v735 = vand.u32 %v42, 4294901760
    %v736 = vsub.f32 %v42, %v735
    %v737 = vand.u32 %v736, 4294901760
    %738 = vmatprep.mubr.f32.mxu0 %v737
    %v739 = vand.u32 %v41, 4294901760
    %v740 = vsub.f32 %v41, %v739
    %v741 = vand.u32 %v740, 4294901760
    %742 = vmatmul.mubr.f32.gmra.mrb[0].mxu0 %v741
    %v743 = vpop.f32.mrb[0].mxu0
    %v744 = vadd.f32 %v636, %v743
    %v745 = vpop.f32.mrb[0].mxu0
    %746 = vdwg.mxu0
    %747 = vmatprep.subr.mxu0 0.0
    %v748 = vand.u32 %v48, 4294901760
    %v749 = vsub.f32 %v48, %v748
    %v750 = vand.u32 %v749, 4294901760
    %751 = vmatpush1.msra.mxu0 %v750
    %752 = vmatprep.subr.mxu0 0.0
    %v753 = vand.u32 %v49, 4294901760
    %v754 = vsub.f32 %v49, %v753
    %v755 = vand.u32 %v754, 4294901760
    %756 = vmatpush1.msra.mxu0 %v755
    %757 = vmatprep.subr.mxu0 0.0
    %v758 = vand.u32 %v50, 4294901760
    %v759 = vsub.f32 %v50, %v758
    %v760 = vand.u32 %v759, 4294901760
    %761 = vmatpush1.msra.mxu0 %v760
    %762 = vmatprep.subr.mxu0 0.0
    %v763 = vand.u32 %v51, 4294901760
    %v764 = vsub.f32 %v51, %v763
    %v765 = vand.u32 %v764, 4294901760
    %766 = vmatpush1.msra.mxu0 %v765
    %767 = vmatprep.subr.mxu0 0.0
    %v768 = vand.u32 %v52, 4294901760
    %v769 = vsub.f32 %v52, %v768
    %v770 = vand.u32 %v769, 4294901760
    %771 = vmatpush1.msra.mxu0 %v770
    %772 = vmatprep.subr.mxu0 0.0
    %v773 = vand.u32 %v53, 4294901760
    %v774 = vsub.f32 %v53, %v773
    %v775 = vand.u32 %v774, 4294901760
    %776 = vmatpush1.msra.mxu0 %v775
    %777 = vmatprep.subr.mxu0 0.0
    %v778 = vand.u32 %v54, 4294901760
    %v779 = vsub.f32 %v54, %v778
    %v780 = vand.u32 %v779, 4294901760
    %781 = vmatpush1.msra.mxu0 %v780
    %782 = vmatprep.subr.mxu0 0.0
    %v783 = vand.u32 %v55, 4294901760
    %v784 = vsub.f32 %v55, %v783
    %v785 = vand.u32 %v784, 4294901760
    %786 = vmatpush1.msra.mxu0 %v785
    %787 = vmatprep.subr.mxu0 0.0
    %v788 = vand.u32 %v56, 4294901760
    %v789 = vsub.f32 %v56, %v788
    %v790 = vand.u32 %v789, 4294901760
    %791 = vmatpush1.msra.mxu0 %v790
    %792 = vmatprep.subr.mxu0 0.0
    %v793 = vand.u32 %v57, 4294901760
    %v794 = vsub.f32 %v57, %v793
    %v795 = vand.u32 %v794, 4294901760
    %796 = vmatpush1.msra.mxu0 %v795
    %797 = vmatprep.subr.mxu0 0.0
    %v798 = vand.u32 %v58, 4294901760
    %v799 = vsub.f32 %v58, %v798
    %v800 = vand.u32 %v799, 4294901760
    %801 = vmatpush1.msra.mxu0 %v800
    %802 = vmatprep.subr.mxu0 0.0
    %v803 = vand.u32 %v59, 4294901760
    %v804 = vsub.f32 %v59, %v803
    %v805 = vand.u32 %v804, 4294901760
    %806 = vmatpush1.msra.mxu0 %v805
    %807 = vmatprep.subr.mxu0 0.0
    %v808 = vand.u32 %v60, 4294901760
    %v809 = vsub.f32 %v60, %v808
    %v810 = vand.u32 %v809, 4294901760
    %811 = vmatpush1.msra.mxu0 %v810
    %812 = vmatprep.subr.mxu0 0.0
    %v813 = vand.u32 %v61, 4294901760
    %v814 = vsub.f32 %v61, %v813
    %v815 = vand.u32 %v814, 4294901760
    %816 = vmatpush1.msra.mxu0 %v815
    %817 = vmatprep.subr.mxu0 0.0
    %v818 = vand.u32 %v62, 4294901760
    %v819 = vsub.f32 %v62, %v818
    %v820 = vand.u32 %v819, 4294901760
    %821 = vmatpush1.msra.mxu0 %v820
    %822 = vmatprep.subr.mxu0 0.0
    %v823 = vand.u32 %v63, 4294901760
    %v824 = vsub.f32 %v63, %v823
    %v825 = vand.u32 %v824, 4294901760
    %826 = vmatpush1.msra.mxu0 %v825
    %827 = vmatprep.subr.mxu0 0.0
    %v828 = vand.u32 %v64, 4294901760
    %v829 = vsub.f32 %v64, %v828
    %v830 = vand.u32 %v829, 4294901760
    %831 = vmatpush1.msra.mxu0 %v830
    %832 = vmatprep.subr.mxu0 0.0
    %v833 = vand.u32 %v65, 4294901760
    %v834 = vsub.f32 %v65, %v833
    %v835 = vand.u32 %v834, 4294901760
    %836 = vmatpush1.msra.mxu0 %v835
    %837 = vmatprep.subr.mxu0 0.0
    %v838 = vand.u32 %v66, 4294901760
    %v839 = vsub.f32 %v66, %v838
    %v840 = vand.u32 %v839, 4294901760
    %841 = vmatpush1.msra.mxu0 %v840
    %842 = vmatprep.subr.mxu0 0.0
    %v843 = vand.u32 %v67, 4294901760
    %v844 = vsub.f32 %v67, %v843
    %v845 = vand.u32 %v844, 4294901760
    %846 = vmatpush1.msra.mxu0 %v845
    %847 = vmatprep.subr.mxu0 0.0
    %v848 = vand.u32 %v68, 4294901760
    %v849 = vsub.f32 %v68, %v848
    %v850 = vand.u32 %v849, 4294901760
    %851 = vmatpush1.msra.mxu0 %v850
    %852 = vmatprep.subr.mxu0 0.0
    %v853 = vand.u32 %v69, 4294901760
    %v854 = vsub.f32 %v69, %v853
    %v855 = vand.u32 %v854, 4294901760
    %856 = vmatpush1.msra.mxu0 %v855
    %857 = vmatprep.subr.mxu0 0.0
    %v858 = vand.u32 %v70, 4294901760
    %v859 = vsub.f32 %v70, %v858
    %v860 = vand.u32 %v859, 4294901760
    %861 = vmatpush1.msra.mxu0 %v860
    %862 = vmatprep.subr.mxu0 0.0
    %v863 = vand.u32 %v71, 4294901760
    %v864 = vsub.f32 %v71, %v863
    %v865 = vand.u32 %v864, 4294901760
    %866 = vmatpush1.msra.mxu0 %v865
    %867 = vmatprep.subr.mxu0 0.0
    %v868 = vand.u32 %v72, 4294901760
    %v869 = vsub.f32 %v72, %v868
    %v870 = vand.u32 %v869, 4294901760
    %871 = vmatpush1.msra.mxu0 %v870
    %872 = vmatprep.subr.mxu0 0.0
    %v873 = vand.u32 %v73, 4294901760
    %v874 = vsub.f32 %v73, %v873
    %v875 = vand.u32 %v874, 4294901760
    %876 = vmatpush1.msra.mxu0 %v875
    %877 = vmatprep.subr.mxu0 0.0
    %v878 = vand.u32 %v74, 4294901760
    %v879 = vsub.f32 %v74, %v878
    %v880 = vand.u32 %v879, 4294901760
    %881 = vmatpush1.msra.mxu0 %v880
    %882 = vmatprep.subr.mxu0 0.0
    %v883 = vand.u32 %v75, 4294901760
    %v884 = vsub.f32 %v75, %v883
    %v885 = vand.u32 %v884, 4294901760
    %886 = vmatpush1.msra.mxu0 %v885
    %887 = vmatprep.subr.mxu0 0.0
    %v888 = vand.u32 %v76, 4294901760
    %v889 = vsub.f32 %v76, %v888
    %v890 = vand.u32 %v889, 4294901760
    %891 = vmatpush1.msra.mxu0 %v890
    %892 = vmatprep.subr.mxu0 0.0
    %v893 = vand.u32 %v77, 4294901760
    %v894 = vsub.f32 %v77, %v893
    %v895 = vand.u32 %v894, 4294901760
    %896 = vmatpush1.msra.mxu0 %v895
    %897 = vmatprep.subr.mxu0 0.0
    %v898 = vand.u32 %v78, 4294901760
    %v899 = vsub.f32 %v78, %v898
    %v900 = vand.u32 %v899, 4294901760
    %901 = vmatpush1.msra.mxu0 %v900
    %902 = vmatprep.subr.mxu0 0.0
    %v903 = vand.u32 %v79, 4294901760
    %v904 = vsub.f32 %v79, %v903
    %v905 = vand.u32 %v904, 4294901760
    %906 = vmatpush1.msra.mxu0 %v905
    %v907 = vand.u32 %v42, 4294901760
    %908 = vmatprep.mubr.f32.mxu0 %v907
    %v909 = vand.u32 %v41, 4294901760
    %910 = vmatmul.mubr.f32.gmra.mrb[0].mxu0 %v909
    %v911 = vpop.f32.mrb[0].mxu0
    %v912 = vadd.f32 %v744, %v911
    %v913 = vpop.f32.mrb[0].mxu0
    %914 = vdwg.mxu0
    %915 = vmatprep.subr.mxu0 0.0
    %v916 = vand.u32 %v48, 4294901760
    %917 = vmatpush1.msra.mxu0 %v916
    %918 = vmatprep.subr.mxu0 0.0
    %v919 = vand.u32 %v49, 4294901760
    %920 = vmatpush1.msra.mxu0 %v919
    %921 = vmatprep.subr.mxu0 0.0
    %v922 = vand.u32 %v50, 4294901760
    %923 = vmatpush1.msra.mxu0 %v922
    %924 = vmatprep.subr.mxu0 0.0
    %v925 = vand.u32 %v51, 4294901760
    %926 = vmatpush1.msra.mxu0 %v925
    %927 = vmatprep.subr.mxu0 0.0
    %v928 = vand.u32 %v52, 4294901760
    %929 = vmatpush1.msra.mxu0 %v928
    %930 = vmatprep.subr.mxu0 0.0
    %v931 = vand.u32 %v53, 4294901760
    %932 = vmatpush1.msra.mxu0 %v931
    %933 = vmatprep.subr.mxu0 0.0
    %v934 = vand.u32 %v54, 4294901760
    %935 = vmatpush1.msra.mxu0 %v934
    %936 = vmatprep.subr.mxu0 0.0
    %v937 = vand.u32 %v55, 4294901760
    %938 = vmatpush1.msra.mxu0 %v937
    %939 = vmatprep.subr.mxu0 0.0
    %v940 = vand.u32 %v56, 4294901760
    %941 = vmatpush1.msra.mxu0 %v940
    %942 = vmatprep.subr.mxu0 0.0
    %v943 = vand.u32 %v57, 4294901760
    %944 = vmatpush1.msra.mxu0 %v943
    %945 = vmatprep.subr.mxu0 0.0
    %v946 = vand.u32 %v58, 4294901760
    %947 = vmatpush1.msra.mxu0 %v946
    %948 = vmatprep.subr.mxu0 0.0
    %v949 = vand.u32 %v59, 4294901760
    %950 = vmatpush1.msra.mxu0 %v949
    %951 = vmatprep.subr.mxu0 0.0
    %v952 = vand.u32 %v60, 4294901760
    %953 = vmatpush1.msra.mxu0 %v952
    %954 = vmatprep.subr.mxu0 0.0
    %v955 = vand.u32 %v61, 4294901760
    %956 = vmatpush1.msra.mxu0 %v955
    %957 = vmatprep.subr.mxu0 0.0
    %v958 = vand.u32 %v62, 4294901760
    %959 = vmatpush1.msra.mxu0 %v958
    %960 = vmatprep.subr.mxu0 0.0
    %v961 = vand.u32 %v63, 4294901760
    %962 = vmatpush1.msra.mxu0 %v961
    %963 = vmatprep.subr.mxu0 0.0
    %v964 = vand.u32 %v64, 4294901760
    %965 = vmatpush1.msra.mxu0 %v964
    %966 = vmatprep.subr.mxu0 0.0
    %v967 = vand.u32 %v65, 4294901760
    %968 = vmatpush1.msra.mxu0 %v967
    %969 = vmatprep.subr.mxu0 0.0
    %v970 = vand.u32 %v66, 4294901760
    %971 = vmatpush1.msra.mxu0 %v970
    %972 = vmatprep.subr.mxu0 0.0
    %v973 = vand.u32 %v67, 4294901760
    %974 = vmatpush1.msra.mxu0 %v973
    %975 = vmatprep.subr.mxu0 0.0
    %v976 = vand.u32 %v68, 4294901760
    %977 = vmatpush1.msra.mxu0 %v976
    %978 = vmatprep.subr.mxu0 0.0
    %v979 = vand.u32 %v69, 4294901760
    %980 = vmatpush1.msra.mxu0 %v979
    %981 = vmatprep.subr.mxu0 0.0
    %v982 = vand.u32 %v70, 4294901760
    %983 = vmatpush1.msra.mxu0 %v982
    %984 = vmatprep.subr.mxu0 0.0
    %v985 = vand.u32 %v71, 4294901760
    %986 = vmatpush1.msra.mxu0 %v985
    %987 = vmatprep.subr.mxu0 0.0
    %v988 = vand.u32 %v72, 4294901760
    %989 = vmatpush1.msra.mxu0 %v988
    %990 = vmatprep.subr.mxu0 0.0
    %v991 = vand.u32 %v73, 4294901760
    %992 = vmatpush1.msra.mxu0 %v991
    %993 = vmatprep.subr.mxu0 0.0
    %v994 = vand.u32 %v74, 4294901760
    %995 = vmatpush1.msra.mxu0 %v994
    %996 = vmatprep.subr.mxu0 0.0
    %v997 = vand.u32 %v75, 4294901760
    %998 = vmatpush1.msra.mxu0 %v997
    %999 = vmatprep.subr.mxu0 0.0
    %v1000 = vand.u32 %v76, 4294901760
    %1001 = vmatpush1.msra.mxu0 %v1000
    %1002 = vmatprep.subr.mxu0 0.0
    %v1003 = vand.u32 %v77, 4294901760
    %1004 = vmatpush1.msra.mxu0 %v1003
    %1005 = vmatprep.subr.mxu0 0.0
    %v1006 = vand.u32 %v78, 4294901760
    %1007 = vmatpush1.msra.mxu0 %v1006
    %1008 = vmatprep.subr.mxu0 0.0
    %v1009 = vand.u32 %v79, 4294901760
    %1010 = vmatpush1.msra.mxu0 %v1009
    %v1011 = vand.u32 %v42, 4294901760
    %1012 = vmatprep.mubr.f32.mxu0 %v1011
    %v1013 = vand.u32 %v41, 4294901760
    %1014 = vmatmul.mubr.f32.gmra.mrb[0].mxu0 %v1013
    %v1015 = vpop.f32.mrb[0].mxu0
    %v1016 = vadd.f32 %v912, %v1015
    %v1017 = vpop.f32.mrb[0].mxu0
    %1018 = vdwg.mxu0
    %1019 = vmatprep.subr.mxu0 0.0
    %v1020 = vand.u32 %v80, 4294901760
    %1021 = vmatpush1.msra.mxu0 %v1020
    %1022 = vmatprep.subr.mxu0 0.0
    %v1023 = vand.u32 %v81, 4294901760
    %1024 = vmatpush1.msra.mxu0 %v1023
    %1025 = vmatprep.subr.mxu0 0.0
    %v1026 = vand.u32 %v82, 4294901760
    %1027 = vmatpush1.msra.mxu0 %v1026
    %1028 = vmatprep.subr.mxu0 0.0
    %v1029 = vand.u32 %v83, 4294901760
    %1030 = vmatpush1.msra.mxu0 %v1029
    %1031 = vmatprep.subr.mxu0 0.0
    %v1032 = vand.u32 %v84, 4294901760
    %1033 = vmatpush1.msra.mxu0 %v1032
    %1034 = vmatprep.subr.mxu0 0.0
    %v1035 = vand.u32 %v85, 4294901760
    %1036 = vmatpush1.msra.mxu0 %v1035
    %1037 = vmatprep.subr.mxu0 0.0
    %v1038 = vand.u32 %v86, 4294901760
    %1039 = vmatpush1.msra.mxu0 %v1038
    %1040 = vmatprep.subr.mxu0 0.0
    %v1041 = vand.u32 %v87, 4294901760
    %1042 = vmatpush1.msra.mxu0 %v1041
    %1043 = vmatprep.subr.mxu0 0.0
    %v1044 = vand.u32 %v88, 4294901760
    %1045 = vmatpush1.msra.mxu0 %v1044
    %1046 = vmatprep.subr.mxu0 0.0
    %v1047 = vand.u32 %v89, 4294901760
    %1048 = vmatpush1.msra.mxu0 %v1047
    %1049 = vmatprep.subr.mxu0 0.0
    %v1050 = vand.u32 %v90, 4294901760
    %1051 = vmatpush1.msra.mxu0 %v1050
    %1052 = vmatprep.subr.mxu0 0.0
    %v1053 = vand.u32 %v91, 4294901760
    %1054 = vmatpush1.msra.mxu0 %v1053
    %1055 = vmatprep.subr.mxu0 0.0
    %v1056 = vand.u32 %v92, 4294901760
    %1057 = vmatpush1.msra.mxu0 %v1056
    %1058 = vmatprep.subr.mxu0 0.0
    %v1059 = vand.u32 %v93, 4294901760
    %1060 = vmatpush1.msra.mxu0 %v1059
    %1061 = vmatprep.subr.mxu0 0.0
    %v1062 = vand.u32 %v94, 4294901760
    %1063 = vmatpush1.msra.mxu0 %v1062
    %1064 = vmatprep.subr.mxu0 0.0
    %v1065 = vand.u32 %v95, 4294901760
    %1066 = vmatpush1.msra.mxu0 %v1065
    %1067 = vmatprep.subr.mxu0 0.0
    %v1068 = vand.u32 %v96, 4294901760
    %1069 = vmatpush1.msra.mxu0 %v1068
    %1070 = vmatprep.subr.mxu0 0.0
    %v1071 = vand.u32 %v97, 4294901760
    %1072 = vmatpush1.msra.mxu0 %v1071
    %1073 = vmatprep.subr.mxu0 0.0
    %v1074 = vand.u32 %v98, 4294901760
    %1075 = vmatpush1.msra.mxu0 %v1074
    %1076 = vmatprep.subr.mxu0 0.0
    %v1077 = vand.u32 %v99, 4294901760
    %1078 = vmatpush1.msra.mxu0 %v1077
    %1079 = vmatprep.subr.mxu0 0.0
    %v1080 = vand.u32 %v100, 4294901760
    %1081 = vmatpush1.msra.mxu0 %v1080
    %1082 = vmatprep.subr.mxu0 0.0
    %v1083 = vand.u32 %v101, 4294901760
    %1084 = vmatpush1.msra.mxu0 %v1083
    %1085 = vmatprep.subr.mxu0 0.0
    %v1086 = vand.u32 %v102, 4294901760
    %1087 = vmatpush1.msra.mxu0 %v1086
    %1088 = vmatprep.subr.mxu0 0.0
    %v1089 = vand.u32 %v103, 4294901760
    %1090 = vmatpush1.msra.mxu0 %v1089
    %1091 = vmatprep.subr.mxu0 0.0
    %v1092 = vand.u32 %v104, 4294901760
    %1093 = vmatpush1.msra.mxu0 %v1092
    %1094 = vmatprep.subr.mxu0 0.0
    %v1095 = vand.u32 %v105, 4294901760
    %1096 = vmatpush1.msra.mxu0 %v1095
    %1097 = vmatprep.subr.mxu0 0.0
    %v1098 = vand.u32 %v106, 4294901760
    %1099 = vmatpush1.msra.mxu0 %v1098
    %1100 = vmatprep.subr.mxu0 0.0
    %v1101 = vand.u32 %v107, 4294901760
    %1102 = vmatpush1.msra.mxu0 %v1101
    %1103 = vmatprep.subr.mxu0 0.0
    %v1104 = vand.u32 %v108, 4294901760
    %1105 = vmatpush1.msra.mxu0 %v1104
    %1106 = vmatprep.subr.mxu0 0.0
    %v1107 = vand.u32 %v109, 4294901760
    %1108 = vmatpush1.msra.mxu0 %v1107
    %1109 = vmatprep.subr.mxu0 0.0
    %v1110 = vand.u32 %v110, 4294901760
    %1111 = vmatpush1.msra.mxu0 %v1110
    %1112 = vmatprep.subr.mxu0 0.0
    %v1113 = vand.u32 %v111, 4294901760
    %1114 = vmatpush1.msra.mxu0 %v1113
    %v1115 = vand.u32 %v44, 4294901760
    %v1116 = vsub.f32 %v44, %v1115
    %v1117 = vand.u32 %v1116, 4294901760
    %v1118 = vsub.f32 %v1116, %v1117
    %v1119 = vand.u32 %v1118, 4294901760
    %1120 = vmatprep.mubr.f32.mxu0 %v1119
    %v1121 = vand.u32 %v43, 4294901760
    %v1122 = vsub.f32 %v43, %v1121
    %v1123 = vand.u32 %v1122, 4294901760
    %v1124 = vsub.f32 %v1122, %v1123
    %v1125 = vand.u32 %v1124, 4294901760
    %1126 = vmatmul.mubr.f32.gmra.mrb[0].mxu0 %v1125
    %v1127 = vpop.f32.mrb[0].mxu0
    %v1128 = vadd.f32 %v1016, %v1127
    %v1129 = vpop.f32.mrb[0].mxu0
    %1130 = vdwg.mxu0
    %1131 = vmatprep.subr.mxu0 0.0
    %v1132 = vand.u32 %v80, 4294901760
    %v1133 = vsub.f32 %v80, %v1132
    %v1134 = vand.u32 %v1133, 4294901760
    %v1135 = vsub.f32 %v1133, %v1134
    %v1136 = vand.u32 %v1135, 4294901760
    %1137 = vmatpush1.msra.mxu0 %v1136
    %1138 = vmatprep.subr.mxu0 0.0
    %v1139 = vand.u32 %v81, 4294901760
    %v1140 = vsub.f32 %v81, %v1139
    %v1141 = vand.u32 %v1140, 4294901760
    %v1142 = vsub.f32 %v1140, %v1141
    %v1143 = vand.u32 %v1142, 4294901760
    %1144 = vmatpush1.msra.mxu0 %v1143
    %1145 = vmatprep.subr.mxu0 0.0
    %v1146 = vand.u32 %v82, 4294901760
    %v1147 = vsub.f32 %v82, %v1146
    %v1148 = vand.u32 %v1147, 4294901760
    %v1149 = vsub.f32 %v1147, %v1148
    %v1150 = vand.u32 %v1149, 4294901760
    %1151 = vmatpush1.msra.mxu0 %v1150
    %1152 = vmatprep.subr.mxu0 0.0
    %v1153 = vand.u32 %v83, 4294901760
    %v1154 = vsub.f32 %v83, %v1153
    %v1155 = vand.u32 %v1154, 4294901760
    %v1156 = vsub.f32 %v1154, %v1155
    %v1157 = vand.u32 %v1156, 4294901760
    %1158 = vmatpush1.msra.mxu0 %v1157
    %1159 = vmatprep.subr.mxu0 0.0
    %v1160 = vand.u32 %v84, 4294901760
    %v1161 = vsub.f32 %v84, %v1160
    %v1162 = vand.u32 %v1161, 4294901760
    %v1163 = vsub.f32 %v1161, %v1162
    %v1164 = vand.u32 %v1163, 4294901760
    %1165 = vmatpush1.msra.mxu0 %v1164
    %1166 = vmatprep.subr.mxu0 0.0
    %v1167 = vand.u32 %v85, 4294901760
    %v1168 = vsub.f32 %v85, %v1167
    %v1169 = vand.u32 %v1168, 4294901760
    %v1170 = vsub.f32 %v1168, %v1169
    %v1171 = vand.u32 %v1170, 4294901760
    %1172 = vmatpush1.msra.mxu0 %v1171
    %1173 = vmatprep.subr.mxu0 0.0
    %v1174 = vand.u32 %v86, 4294901760
    %v1175 = vsub.f32 %v86, %v1174
    %v1176 = vand.u32 %v1175, 4294901760
    %v1177 = vsub.f32 %v1175, %v1176
    %v1178 = vand.u32 %v1177, 4294901760
    %1179 = vmatpush1.msra.mxu0 %v1178
    %1180 = vmatprep.subr.mxu0 0.0
    %v1181 = vand.u32 %v87, 4294901760
    %v1182 = vsub.f32 %v87, %v1181
    %v1183 = vand.u32 %v1182, 4294901760
    %v1184 = vsub.f32 %v1182, %v1183
    %v1185 = vand.u32 %v1184, 4294901760
    %1186 = vmatpush1.msra.mxu0 %v1185
    %1187 = vmatprep.subr.mxu0 0.0
    %v1188 = vand.u32 %v88, 4294901760
    %v1189 = vsub.f32 %v88, %v1188
    %v1190 = vand.u32 %v1189, 4294901760
    %v1191 = vsub.f32 %v1189, %v1190
    %v1192 = vand.u32 %v1191, 4294901760
    %1193 = vmatpush1.msra.mxu0 %v1192
    %1194 = vmatprep.subr.mxu0 0.0
    %v1195 = vand.u32 %v89, 4294901760
    %v1196 = vsub.f32 %v89, %v1195
    %v1197 = vand.u32 %v1196, 4294901760
    %v1198 = vsub.f32 %v1196, %v1197
    %v1199 = vand.u32 %v1198, 4294901760
    %1200 = vmatpush1.msra.mxu0 %v1199
    %1201 = vmatprep.subr.mxu0 0.0
    %v1202 = vand.u32 %v90, 4294901760
    %v1203 = vsub.f32 %v90, %v1202
    %v1204 = vand.u32 %v1203, 4294901760
    %v1205 = vsub.f32 %v1203, %v1204
    %v1206 = vand.u32 %v1205, 4294901760
    %1207 = vmatpush1.msra.mxu0 %v1206
    %1208 = vmatprep.subr.mxu0 0.0
    %v1209 = vand.u32 %v91, 4294901760
    %v1210 = vsub.f32 %v91, %v1209
    %v1211 = vand.u32 %v1210, 4294901760
    %v1212 = vsub.f32 %v1210, %v1211
    %v1213 = vand.u32 %v1212, 4294901760
    %1214 = vmatpush1.msra.mxu0 %v1213
    %1215 = vmatprep.subr.mxu0 0.0
    %v1216 = vand.u32 %v92, 4294901760
    %v1217 = vsub.f32 %v92, %v1216
    %v1218 = vand.u32 %v1217, 4294901760
    %v1219 = vsub.f32 %v1217, %v1218
    %v1220 = vand.u32 %v1219, 4294901760
    %1221 = vmatpush1.msra.mxu0 %v1220
    %1222 = vmatprep.subr.mxu0 0.0
    %v1223 = vand.u32 %v93, 4294901760
    %v1224 = vsub.f32 %v93, %v1223
    %v1225 = vand.u32 %v1224, 4294901760
    %v1226 = vsub.f32 %v1224, %v1225
    %v1227 = vand.u32 %v1226, 4294901760
    %1228 = vmatpush1.msra.mxu0 %v1227
    %1229 = vmatprep.subr.mxu0 0.0
    %v1230 = vand.u32 %v94, 4294901760
    %v1231 = vsub.f32 %v94, %v1230
    %v1232 = vand.u32 %v1231, 4294901760
    %v1233 = vsub.f32 %v1231, %v1232
    %v1234 = vand.u32 %v1233, 4294901760
    %1235 = vmatpush1.msra.mxu0 %v1234
    %1236 = vmatprep.subr.mxu0 0.0
    %v1237 = vand.u32 %v95, 4294901760
    %v1238 = vsub.f32 %v95, %v1237
    %v1239 = vand.u32 %v1238, 4294901760
    %v1240 = vsub.f32 %v1238, %v1239
    %v1241 = vand.u32 %v1240, 4294901760
    %1242 = vmatpush1.msra.mxu0 %v1241
    %1243 = vmatprep.subr.mxu0 0.0
    %v1244 = vand.u32 %v96, 4294901760
    %v1245 = vsub.f32 %v96, %v1244
    %v1246 = vand.u32 %v1245, 4294901760
    %v1247 = vsub.f32 %v1245, %v1246
    %v1248 = vand.u32 %v1247, 4294901760
    %1249 = vmatpush1.msra.mxu0 %v1248
    %1250 = vmatprep.subr.mxu0 0.0
    %v1251 = vand.u32 %v97, 4294901760
    %v1252 = vsub.f32 %v97, %v1251
    %v1253 = vand.u32 %v1252, 4294901760
    %v1254 = vsub.f32 %v1252, %v1253
    %v1255 = vand.u32 %v1254, 4294901760
    %1256 = vmatpush1.msra.mxu0 %v1255
    %1257 = vmatprep.subr.mxu0 0.0
    %v1258 = vand.u32 %v98, 4294901760
    %v1259 = vsub.f32 %v98, %v1258
    %v1260 = vand.u32 %v1259, 4294901760
    %v1261 = vsub.f32 %v1259, %v1260
    %v1262 = vand.u32 %v1261, 4294901760
    %1263 = vmatpush1.msra.mxu0 %v1262
    %1264 = vmatprep.subr.mxu0 0.0
    %v1265 = vand.u32 %v99, 4294901760
    %v1266 = vsub.f32 %v99, %v1265
    %v1267 = vand.u32 %v1266, 4294901760
    %v1268 = vsub.f32 %v1266, %v1267
    %v1269 = vand.u32 %v1268, 4294901760
    %1270 = vmatpush1.msra.mxu0 %v1269
    %1271 = vmatprep.subr.mxu0 0.0
    %v1272 = vand.u32 %v100, 4294901760
    %v1273 = vsub.f32 %v100, %v1272
    %v1274 = vand.u32 %v1273, 4294901760
    %v1275 = vsub.f32 %v1273, %v1274
    %v1276 = vand.u32 %v1275, 4294901760
    %1277 = vmatpush1.msra.mxu0 %v1276
    %1278 = vmatprep.subr.mxu0 0.0
    %v1279 = vand.u32 %v101, 4294901760
    %v1280 = vsub.f32 %v101, %v1279
    %v1281 = vand.u32 %v1280, 4294901760
    %v1282 = vsub.f32 %v1280, %v1281
    %v1283 = vand.u32 %v1282, 4294901760
    %1284 = vmatpush1.msra.mxu0 %v1283
    %1285 = vmatprep.subr.mxu0 0.0
    %v1286 = vand.u32 %v102, 4294901760
    %v1287 = vsub.f32 %v102, %v1286
    %v1288 = vand.u32 %v1287, 4294901760
    %v1289 = vsub.f32 %v1287, %v1288
    %v1290 = vand.u32 %v1289, 4294901760
    %1291 = vmatpush1.msra.mxu0 %v1290
    %1292 = vmatprep.subr.mxu0 0.0
    %v1293 = vand.u32 %v103, 4294901760
    %v1294 = vsub.f32 %v103, %v1293
    %v1295 = vand.u32 %v1294, 4294901760
    %v1296 = vsub.f32 %v1294, %v1295
    %v1297 = vand.u32 %v1296, 4294901760
    %1298 = vmatpush1.msra.mxu0 %v1297
    %1299 = vmatprep.subr.mxu0 0.0
    %v1300 = vand.u32 %v104, 4294901760
    %v1301 = vsub.f32 %v104, %v1300
    %v1302 = vand.u32 %v1301, 4294901760
    %v1303 = vsub.f32 %v1301, %v1302
    %v1304 = vand.u32 %v1303, 4294901760
    %1305 = vmatpush1.msra.mxu0 %v1304
    %1306 = vmatprep.subr.mxu0 0.0
    %v1307 = vand.u32 %v105, 4294901760
    %v1308 = vsub.f32 %v105, %v1307
    %v1309 = vand.u32 %v1308, 4294901760
    %v1310 = vsub.f32 %v1308, %v1309
    %v1311 = vand.u32 %v1310, 4294901760
    %1312 = vmatpush1.msra.mxu0 %v1311
    %1313 = vmatprep.subr.mxu0 0.0
    %v1314 = vand.u32 %v106, 4294901760
    %v1315 = vsub.f32 %v106, %v1314
    %v1316 = vand.u32 %v1315, 4294901760
    %v1317 = vsub.f32 %v1315, %v1316
    %v1318 = vand.u32 %v1317, 4294901760
    %1319 = vmatpush1.msra.mxu0 %v1318
    %1320 = vmatprep.subr.mxu0 0.0
    %v1321 = vand.u32 %v107, 4294901760
    %v1322 = vsub.f32 %v107, %v1321
    %v1323 = vand.u32 %v1322, 4294901760
    %v1324 = vsub.f32 %v1322, %v1323
    %v1325 = vand.u32 %v1324, 4294901760
    %1326 = vmatpush1.msra.mxu0 %v1325
    %1327 = vmatprep.subr.mxu0 0.0
    %v1328 = vand.u32 %v108, 4294901760
    %v1329 = vsub.f32 %v108, %v1328
    %v1330 = vand.u32 %v1329, 4294901760
    %v1331 = vsub.f32 %v1329, %v1330
    %v1332 = vand.u32 %v1331, 4294901760
    %1333 = vmatpush1.msra.mxu0 %v1332
    %1334 = vmatprep.subr.mxu0 0.0
    %v1335 = vand.u32 %v109, 4294901760
    %v1336 = vsub.f32 %v109, %v1335
    %v1337 = vand.u32 %v1336, 4294901760
    %v1338 = vsub.f32 %v1336, %v1337
    %v1339 = vand.u32 %v1338, 4294901760
    %1340 = vmatpush1.msra.mxu0 %v1339
    %1341 = vmatprep.subr.mxu0 0.0
    %v1342 = vand.u32 %v110, 4294901760
    %v1343 = vsub.f32 %v110, %v1342
    %v1344 = vand.u32 %v1343, 4294901760
    %v1345 = vsub.f32 %v1343, %v1344
    %v1346 = vand.u32 %v1345, 4294901760
    %1347 = vmatpush1.msra.mxu0 %v1346
    %1348 = vmatprep.subr.mxu0 0.0
    %v1349 = vand.u32 %v111, 4294901760
    %v1350 = vsub.f32 %v111, %v1349
    %v1351 = vand.u32 %v1350, 4294901760
    %v1352 = vsub.f32 %v1350, %v1351
    %v1353 = vand.u32 %v1352, 4294901760
    %1354 = vmatpush1.msra.mxu0 %v1353
    %v1355 = vand.u32 %v44, 4294901760
    %1356 = vmatprep.mubr.f32.mxu0 %v1355
    %v1357 = vand.u32 %v43, 4294901760
    %1358 = vmatmul.mubr.f32.gmra.mrb[0].mxu0 %v1357
    %v1359 = vpop.f32.mrb[0].mxu0
    %v1360 = vadd.f32 %v1128, %v1359
    %v1361 = vpop.f32.mrb[0].mxu0
    %1362 = vdwg.mxu0
    %1363 = vmatprep.subr.mxu0 0.0
    %v1364 = vand.u32 %v80, 4294901760
    %v1365 = vsub.f32 %v80, %v1364
    %1366 = vmatpush1.msra.mxu0 %v1365
    %1367 = vmatprep.subr.mxu0 0.0
    %v1368 = vand.u32 %v81, 4294901760
    %v1369 = vsub.f32 %v81, %v1368
    %1370 = vmatpush1.msra.mxu0 %v1369
    %1371 = vmatprep.subr.mxu0 0.0
    %v1372 = vand.u32 %v82, 4294901760
    %v1373 = vsub.f32 %v82, %v1372
    %1374 = vmatpush1.msra.mxu0 %v1373
    %1375 = vmatprep.subr.mxu0 0.0
    %v1376 = vand.u32 %v83, 4294901760
    %v1377 = vsub.f32 %v83, %v1376
    %1378 = vmatpush1.msra.mxu0 %v1377
    %1379 = vmatprep.subr.mxu0 0.0
    %v1380 = vand.u32 %v84, 4294901760
    %v1381 = vsub.f32 %v84, %v1380
    %1382 = vmatpush1.msra.mxu0 %v1381
    %1383 = vmatprep.subr.mxu0 0.0
    %v1384 = vand.u32 %v85, 4294901760
    %v1385 = vsub.f32 %v85, %v1384
    %1386 = vmatpush1.msra.mxu0 %v1385
    %1387 = vmatprep.subr.mxu0 0.0
    %v1388 = vand.u32 %v86, 4294901760
    %v1389 = vsub.f32 %v86, %v1388
    %1390 = vmatpush1.msra.mxu0 %v1389
    %1391 = vmatprep.subr.mxu0 0.0
    %v1392 = vand.u32 %v87, 4294901760
    %v1393 = vsub.f32 %v87, %v1392
    %1394 = vmatpush1.msra.mxu0 %v1393
    %1395 = vmatprep.subr.mxu0 0.0
    %v1396 = vand.u32 %v88, 4294901760
    %v1397 = vsub.f32 %v88, %v1396
    %1398 = vmatpush1.msra.mxu0 %v1397
    %1399 = vmatprep.subr.mxu0 0.0
    %v1400 = vand.u32 %v89, 4294901760
    %v1401 = vsub.f32 %v89, %v1400
    %1402 = vmatpush1.msra.mxu0 %v1401
    %1403 = vmatprep.subr.mxu0 0.0
    %v1404 = vand.u32 %v90, 4294901760
    %v1405 = vsub.f32 %v90, %v1404
    %1406 = vmatpush1.msra.mxu0 %v1405
    %1407 = vmatprep.subr.mxu0 0.0
    %v1408 = vand.u32 %v91, 4294901760
    %v1409 = vsub.f32 %v91, %v1408
    %1410 = vmatpush1.msra.mxu0 %v1409
    %1411 = vmatprep.subr.mxu0 0.0
    %v1412 = vand.u32 %v92, 4294901760
    %v1413 = vsub.f32 %v92, %v1412
    %1414 = vmatpush1.msra.mxu0 %v1413
    %1415 = vmatprep.subr.mxu0 0.0
    %v1416 = vand.u32 %v93, 4294901760
    %v1417 = vsub.f32 %v93, %v1416
    %1418 = vmatpush1.msra.mxu0 %v1417
    %1419 = vmatprep.subr.mxu0 0.0
    %v1420 = vand.u32 %v94, 4294901760
    %v1421 = vsub.f32 %v94, %v1420
    %1422 = vmatpush1.msra.mxu0 %v1421
    %1423 = vmatprep.subr.mxu0 0.0
    %v1424 = vand.u32 %v95, 4294901760
    %v1425 = vsub.f32 %v95, %v1424
    %1426 = vmatpush1.msra.mxu0 %v1425
    %1427 = vmatprep.subr.mxu0 0.0
    %v1428 = vand.u32 %v96, 4294901760
    %v1429 = vsub.f32 %v96, %v1428
    %1430 = vmatpush1.msra.mxu0 %v1429
    %1431 = vmatprep.subr.mxu0 0.0
    %v1432 = vand.u32 %v97, 4294901760
    %v1433 = vsub.f32 %v97, %v1432
    %1434 = vmatpush1.msra.mxu0 %v1433
    %1435 = vmatprep.subr.mxu0 0.0
    %v1436 = vand.u32 %v98, 4294901760
    %v1437 = vsub.f32 %v98, %v1436
    %1438 = vmatpush1.msra.mxu0 %v1437
    %1439 = vmatprep.subr.mxu0 0.0
    %v1440 = vand.u32 %v99, 4294901760
    %v1441 = vsub.f32 %v99, %v1440
    %1442 = vmatpush1.msra.mxu0 %v1441
    %1443 = vmatprep.subr.mxu0 0.0
    %v1444 = vand.u32 %v100, 4294901760
    %v1445 = vsub.f32 %v100, %v1444
    %1446 = vmatpush1.msra.mxu0 %v1445
    %1447 = vmatprep.subr.mxu0 0.0
    %v1448 = vand.u32 %v101, 4294901760
    %v1449 = vsub.f32 %v101, %v1448
    %1450 = vmatpush1.msra.mxu0 %v1449
    %1451 = vmatprep.subr.mxu0 0.0
    %v1452 = vand.u32 %v102, 4294901760
    %v1453 = vsub.f32 %v102, %v1452
    %1454 = vmatpush1.msra.mxu0 %v1453
    %1455 = vmatprep.subr.mxu0 0.0
    %v1456 = vand.u32 %v103, 4294901760
    %v1457 = vsub.f32 %v103, %v1456
    %1458 = vmatpush1.msra.mxu0 %v1457
    %1459 = vmatprep.subr.mxu0 0.0
    %v1460 = vand.u32 %v104, 4294901760
    %v1461 = vsub.f32 %v104, %v1460
    %1462 = vmatpush1.msra.mxu0 %v1461
    %1463 = vmatprep.subr.mxu0 0.0
    %v1464 = vand.u32 %v105, 4294901760
    %v1465 = vsub.f32 %v105, %v1464
    %1466 = vmatpush1.msra.mxu0 %v1465
    %1467 = vmatprep.subr.mxu0 0.0
    %v1468 = vand.u32 %v106, 4294901760
    %v1469 = vsub.f32 %v106, %v1468
    %1470 = vmatpush1.msra.mxu0 %v1469
    %1471 = vmatprep.subr.mxu0 0.0
    %v1472 = vand.u32 %v107, 4294901760
    %v1473 = vsub.f32 %v107, %v1472
    %1474 = vmatpush1.msra.mxu0 %v1473
    %1475 = vmatprep.subr.mxu0 0.0
    %v1476 = vand.u32 %v108, 4294901760
    %v1477 = vsub.f32 %v108, %v1476
    %1478 = vmatpush1.msra.mxu0 %v1477
    %1479 = vmatprep.subr.mxu0 0.0
    %v1480 = vand.u32 %v109, 4294901760
    %v1481 = vsub.f32 %v109, %v1480
    %1482 = vmatpush1.msra.mxu0 %v1481
    %1483 = vmatprep.subr.mxu0 0.0
    %v1484 = vand.u32 %v110, 4294901760
    %v1485 = vsub.f32 %v110, %v1484
    %1486 = vmatpush1.msra.mxu0 %v1485
    %1487 = vmatprep.subr.mxu0 0.0
    %v1488 = vand.u32 %v111, 4294901760
    %v1489 = vsub.f32 %v111, %v1488
    %1490 = vmatpush1.msra.mxu0 %v1489
    %v1491 = vand.u32 %v44, 4294901760
    %v1492 = vsub.f32 %v44, %v1491
    %1493 = vmatprep.mubr.f32.mxu0 %v1492
    %v1494 = vand.u32 %v43, 4294901760
    %v1495 = vsub.f32 %v43, %v1494
    %1496 = vmatmul.mubr.f32.gmra.mrb[0].mxu0 %v1495
    %v1497 = vpop.f32.mrb[0].mxu0
    %v1498 = vadd.f32 %v1360, %v1497
    %v1499 = vpop.f32.mrb[0].mxu0
    %1500 = vdwg.mxu0
    %1501 = vmatprep.subr.mxu0 0.0
    %v1502 = vand.u32 %v80, 4294901760
    %1503 = vmatpush1.msra.mxu0 %v1502
    %1504 = vmatprep.subr.mxu0 0.0
    %v1505 = vand.u32 %v81, 4294901760
    %1506 = vmatpush1.msra.mxu0 %v1505
    %1507 = vmatprep.subr.mxu0 0.0
    %v1508 = vand.u32 %v82, 4294901760
    %1509 = vmatpush1.msra.mxu0 %v1508
    %1510 = vmatprep.subr.mxu0 0.0
    %v1511 = vand.u32 %v83, 4294901760
    %1512 = vmatpush1.msra.mxu0 %v1511
    %1513 = vmatprep.subr.mxu0 0.0
    %v1514 = vand.u32 %v84, 4294901760
    %1515 = vmatpush1.msra.mxu0 %v1514
    %1516 = vmatprep.subr.mxu0 0.0
    %v1517 = vand.u32 %v85, 4294901760
    %1518 = vmatpush1.msra.mxu0 %v1517
    %1519 = vmatprep.subr.mxu0 0.0
    %v1520 = vand.u32 %v86, 4294901760
    %1521 = vmatpush1.msra.mxu0 %v1520
    %1522 = vmatprep.subr.mxu0 0.0
    %v1523 = vand.u32 %v87, 4294901760
    %1524 = vmatpush1.msra.mxu0 %v1523
    %1525 = vmatprep.subr.mxu0 0.0
    %v1526 = vand.u32 %v88, 4294901760
    %1527 = vmatpush1.msra.mxu0 %v1526
    %1528 = vmatprep.subr.mxu0 0.0
    %v1529 = vand.u32 %v89, 4294901760
    %1530 = vmatpush1.msra.mxu0 %v1529
    %1531 = vmatprep.subr.mxu0 0.0
    %v1532 = vand.u32 %v90, 4294901760
    %1533 = vmatpush1.msra.mxu0 %v1532
    %1534 = vmatprep.subr.mxu0 0.0
    %v1535 = vand.u32 %v91, 4294901760
    %1536 = vmatpush1.msra.mxu0 %v1535
    %1537 = vmatprep.subr.mxu0 0.0
    %v1538 = vand.u32 %v92, 4294901760
    %1539 = vmatpush1.msra.mxu0 %v1538
    %1540 = vmatprep.subr.mxu0 0.0
    %v1541 = vand.u32 %v93, 4294901760
    %1542 = vmatpush1.msra.mxu0 %v1541
    %1543 = vmatprep.subr.mxu0 0.0
    %v1544 = vand.u32 %v94, 4294901760
    %1545 = vmatpush1.msra.mxu0 %v1544
    %1546 = vmatprep.subr.mxu0 0.0
    %v1547 = vand.u32 %v95, 4294901760
    %1548 = vmatpush1.msra.mxu0 %v1547
    %1549 = vmatprep.subr.mxu0 0.0
    %v1550 = vand.u32 %v96, 4294901760
    %1551 = vmatpush1.msra.mxu0 %v1550
    %1552 = vmatprep.subr.mxu0 0.0
    %v1553 = vand.u32 %v97, 4294901760
    %1554 = vmatpush1.msra.mxu0 %v1553
    %1555 = vmatprep.subr.mxu0 0.0
    %v1556 = vand.u32 %v98, 4294901760
    %1557 = vmatpush1.msra.mxu0 %v1556
    %1558 = vmatprep.subr.mxu0 0.0
    %v1559 = vand.u32 %v99, 4294901760
    %1560 = vmatpush1.msra.mxu0 %v1559
    %1561 = vmatprep.subr.mxu0 0.0
    %v1562 = vand.u32 %v100, 4294901760
    %1563 = vmatpush1.msra.mxu0 %v1562
    %1564 = vmatprep.subr.mxu0 0.0
    %v1565 = vand.u32 %v101, 4294901760
    %1566 = vmatpush1.msra.mxu0 %v1565
    %1567 = vmatprep.subr.mxu0 0.0
    %v1568 = vand.u32 %v102, 4294901760
    %1569 = vmatpush1.msra.mxu0 %v1568
    %1570 = vmatprep.subr.mxu0 0.0
    %v1571 = vand.u32 %v103, 4294901760
    %1572 = vmatpush1.msra.mxu0 %v1571
    %1573 = vmatprep.subr.mxu0 0.0
    %v1574 = vand.u32 %v104, 4294901760
    %1575 = vmatpush1.msra.mxu0 %v1574
    %1576 = vmatprep.subr.mxu0 0.0
    %v1577 = vand.u32 %v105, 4294901760
    %1578 = vmatpush1.msra.mxu0 %v1577
    %1579 = vmatprep.subr.mxu0 0.0
    %v1580 = vand.u32 %v106, 4294901760
    %1581 = vmatpush1.msra.mxu0 %v1580
    %1582 = vmatprep.subr.mxu0 0.0
    %v1583 = vand.u32 %v107, 4294901760
    %1584 = vmatpush1.msra.mxu0 %v1583
    %1585 = vmatprep.subr.mxu0 0.0
    %v1586 = vand.u32 %v108, 4294901760
    %1587 = vmatpush1.msra.mxu0 %v1586
    %1588 = vmatprep.subr.mxu0 0.0
    %v1589 = vand.u32 %v109, 4294901760
    %1590 = vmatpush1.msra.mxu0 %v1589
    %1591 = vmatprep.subr.mxu0 0.0
    %v1592 = vand.u32 %v110, 4294901760
    %1593 = vmatpush1.msra.mxu0 %v1592
    %1594 = vmatprep.subr.mxu0 0.0
    %v1595 = vand.u32 %v111, 4294901760
    %1596 = vmatpush1.msra.mxu0 %v1595
    %v1597 = vand.u32 %v44, 4294901760
    %v1598 = vsub.f32 %v44, %v1597
    %v1599 = vand.u32 %v1598, 4294901760
    %1600 = vmatprep.mubr.f32.mxu0 %v1599
    %v1601 = vand.u32 %v43, 4294901760
    %v1602 = vsub.f32 %v43, %v1601
    %v1603 = vand.u32 %v1602, 4294901760
    %1604 = vmatmul.mubr.f32.gmra.mrb[0].mxu0 %v1603
    %v1605 = vpop.f32.mrb[0].mxu0
    %v1606 = vadd.f32 %v1498, %v1605
    %v1607 = vpop.f32.mrb[0].mxu0
    %1608 = vdwg.mxu0
    %1609 = vmatprep.subr.mxu0 0.0
    %v1610 = vand.u32 %v80, 4294901760
    %v1611 = vsub.f32 %v80, %v1610
    %v1612 = vand.u32 %v1611, 4294901760
    %1613 = vmatpush1.msra.mxu0 %v1612
    %1614 = vmatprep.subr.mxu0 0.0
    %v1615 = vand.u32 %v81, 4294901760
    %v1616 = vsub.f32 %v81, %v1615
    %v1617 = vand.u32 %v1616, 4294901760
    %1618 = vmatpush1.msra.mxu0 %v1617
    %1619 = vmatprep.subr.mxu0 0.0
    %v1620 = vand.u32 %v82, 4294901760
    %v1621 = vsub.f32 %v82, %v1620
    %v1622 = vand.u32 %v1621, 4294901760
    %1623 = vmatpush1.msra.mxu0 %v1622
    %1624 = vmatprep.subr.mxu0 0.0
    %v1625 = vand.u32 %v83, 4294901760
    %v1626 = vsub.f32 %v83, %v1625
    %v1627 = vand.u32 %v1626, 4294901760
    %1628 = vmatpush1.msra.mxu0 %v1627
    %1629 = vmatprep.subr.mxu0 0.0
    %v1630 = vand.u32 %v84, 4294901760
    %v1631 = vsub.f32 %v84, %v1630
    %v1632 = vand.u32 %v1631, 4294901760
    %1633 = vmatpush1.msra.mxu0 %v1632
    %1634 = vmatprep.subr.mxu0 0.0
    %v1635 = vand.u32 %v85, 4294901760
    %v1636 = vsub.f32 %v85, %v1635
    %v1637 = vand.u32 %v1636, 4294901760
    %1638 = vmatpush1.msra.mxu0 %v1637
    %1639 = vmatprep.subr.mxu0 0.0
    %v1640 = vand.u32 %v86, 4294901760
    %v1641 = vsub.f32 %v86, %v1640
    %v1642 = vand.u32 %v1641, 4294901760
    %1643 = vmatpush1.msra.mxu0 %v1642
    %1644 = vmatprep.subr.mxu0 0.0
    %v1645 = vand.u32 %v87, 4294901760
    %v1646 = vsub.f32 %v87, %v1645
    %v1647 = vand.u32 %v1646, 4294901760
    %1648 = vmatpush1.msra.mxu0 %v1647
    %1649 = vmatprep.subr.mxu0 0.0
    %v1650 = vand.u32 %v88, 4294901760
    %v1651 = vsub.f32 %v88, %v1650
    %v1652 = vand.u32 %v1651, 4294901760
    %1653 = vmatpush1.msra.mxu0 %v1652
    %1654 = vmatprep.subr.mxu0 0.0
    %v1655 = vand.u32 %v89, 4294901760
    %v1656 = vsub.f32 %v89, %v1655
    %v1657 = vand.u32 %v1656, 4294901760
    %1658 = vmatpush1.msra.mxu0 %v1657
    %1659 = vmatprep.subr.mxu0 0.0
    %v1660 = vand.u32 %v90, 4294901760
    %v1661 = vsub.f32 %v90, %v1660
    %v1662 = vand.u32 %v1661, 4294901760
    %1663 = vmatpush1.msra.mxu0 %v1662
    %1664 = vmatprep.subr.mxu0 0.0
    %v1665 = vand.u32 %v91, 4294901760
    %v1666 = vsub.f32 %v91, %v1665
    %v1667 = vand.u32 %v1666, 4294901760
    %1668 = vmatpush1.msra.mxu0 %v1667
    %1669 = vmatprep.subr.mxu0 0.0
    %v1670 = vand.u32 %v92, 4294901760
    %v1671 = vsub.f32 %v92, %v1670
    %v1672 = vand.u32 %v1671, 4294901760
    %1673 = vmatpush1.msra.mxu0 %v1672
    %1674 = vmatprep.subr.mxu0 0.0
    %v1675 = vand.u32 %v93, 4294901760
    %v1676 = vsub.f32 %v93, %v1675
    %v1677 = vand.u32 %v1676, 4294901760
    %1678 = vmatpush1.msra.mxu0 %v1677
    %1679 = vmatprep.subr.mxu0 0.0
    %v1680 = vand.u32 %v94, 4294901760
    %v1681 = vsub.f32 %v94, %v1680
    %v1682 = vand.u32 %v1681, 4294901760
    %1683 = vmatpush1.msra.mxu0 %v1682
    %1684 = vmatprep.subr.mxu0 0.0
    %v1685 = vand.u32 %v95, 4294901760
    %v1686 = vsub.f32 %v95, %v1685
    %v1687 = vand.u32 %v1686, 4294901760
    %1688 = vmatpush1.msra.mxu0 %v1687
    %1689 = vmatprep.subr.mxu0 0.0
    %v1690 = vand.u32 %v96, 4294901760
    %v1691 = vsub.f32 %v96, %v1690
    %v1692 = vand.u32 %v1691, 4294901760
    %1693 = vmatpush1.msra.mxu0 %v1692
    %1694 = vmatprep.subr.mxu0 0.0
    %v1695 = vand.u32 %v97, 4294901760
    %v1696 = vsub.f32 %v97, %v1695
    %v1697 = vand.u32 %v1696, 4294901760
    %1698 = vmatpush1.msra.mxu0 %v1697
    %1699 = vmatprep.subr.mxu0 0.0
    %v1700 = vand.u32 %v98, 4294901760
    %v1701 = vsub.f32 %v98, %v1700
    %v1702 = vand.u32 %v1701, 4294901760
    %1703 = vmatpush1.msra.mxu0 %v1702
    %1704 = vmatprep.subr.mxu0 0.0
    %v1705 = vand.u32 %v99, 4294901760
    %v1706 = vsub.f32 %v99, %v1705
    %v1707 = vand.u32 %v1706, 4294901760
    %1708 = vmatpush1.msra.mxu0 %v1707
    %1709 = vmatprep.subr.mxu0 0.0
    %v1710 = vand.u32 %v100, 4294901760
    %v1711 = vsub.f32 %v100, %v1710
    %v1712 = vand.u32 %v1711, 4294901760
    %1713 = vmatpush1.msra.mxu0 %v1712
    %1714 = vmatprep.subr.mxu0 0.0
    %v1715 = vand.u32 %v101, 4294901760
    %v1716 = vsub.f32 %v101, %v1715
    %v1717 = vand.u32 %v1716, 4294901760
    %1718 = vmatpush1.msra.mxu0 %v1717
    %1719 = vmatprep.subr.mxu0 0.0
    %v1720 = vand.u32 %v102, 4294901760
    %v1721 = vsub.f32 %v102, %v1720
    %v1722 = vand.u32 %v1721, 4294901760
    %1723 = vmatpush1.msra.mxu0 %v1722
    %1724 = vmatprep.subr.mxu0 0.0
    %v1725 = vand.u32 %v103, 4294901760
    %v1726 = vsub.f32 %v103, %v1725
    %v1727 = vand.u32 %v1726, 4294901760
    %1728 = vmatpush1.msra.mxu0 %v1727
    %1729 = vmatprep.subr.mxu0 0.0
    %v1730 = vand.u32 %v104, 4294901760
    %v1731 = vsub.f32 %v104, %v1730
    %v1732 = vand.u32 %v1731, 4294901760
    %1733 = vmatpush1.msra.mxu0 %v1732
    %1734 = vmatprep.subr.mxu0 0.0
    %v1735 = vand.u32 %v105, 4294901760
    %v1736 = vsub.f32 %v105, %v1735
    %v1737 = vand.u32 %v1736, 4294901760
    %1738 = vmatpush1.msra.mxu0 %v1737
    %1739 = vmatprep.subr.mxu0 0.0
    %v1740 = vand.u32 %v106, 4294901760
    %v1741 = vsub.f32 %v106, %v1740
    %v1742 = vand.u32 %v1741, 4294901760
    %1743 = vmatpush1.msra.mxu0 %v1742
    %1744 = vmatprep.subr.mxu0 0.0
    %v1745 = vand.u32 %v107, 4294901760
    %v1746 = vsub.f32 %v107, %v1745
    %v1747 = vand.u32 %v1746, 4294901760
    %1748 = vmatpush1.msra.mxu0 %v1747
    %1749 = vmatprep.subr.mxu0 0.0
    %v1750 = vand.u32 %v108, 4294901760
    %v1751 = vsub.f32 %v108, %v1750
    %v1752 = vand.u32 %v1751, 4294901760
    %1753 = vmatpush1.msra.mxu0 %v1752
    %1754 = vmatprep.subr.mxu0 0.0
    %v1755 = vand.u32 %v109, 4294901760
    %v1756 = vsub.f32 %v109, %v1755
    %v1757 = vand.u32 %v1756, 4294901760
    %1758 = vmatpush1.msra.mxu0 %v1757
    %1759 = vmatprep.subr.mxu0 0.0
    %v1760 = vand.u32 %v110, 4294901760
    %v1761 = vsub.f32 %v110, %v1760
    %v1762 = vand.u32 %v1761, 4294901760
    %1763 = vmatpush1.msra.mxu0 %v1762
    %1764 = vmatprep.subr.mxu0 0.0
    %v1765 = vand.u32 %v111, 4294901760
    %v1766 = vsub.f32 %v111, %v1765
    %v1767 = vand.u32 %v1766, 4294901760
    %1768 = vmatpush1.msra.mxu0 %v1767
    %v1769 = vand.u32 %v44, 4294901760
    %1770 = vmatprep.mubr.f32.mxu0 %v1769
    %v1771 = vand.u32 %v43, 4294901760
    %1772 = vmatmul.mubr.f32.gmra.mrb[0].mxu0 %v1771
    %v1773 = vpop.f32.mrb[0].mxu0
    %v1774 = vadd.f32 %v1606, %v1773
    %v1775 = vpop.f32.mrb[0].mxu0
    %1776 = vdwg.mxu0
    %1777 = vmatprep.subr.mxu0 0.0
    %v1778 = vand.u32 %v80, 4294901760
    %1779 = vmatpush1.msra.mxu0 %v1778
    %1780 = vmatprep.subr.mxu0 0.0
    %v1781 = vand.u32 %v81, 4294901760
    %1782 = vmatpush1.msra.mxu0 %v1781
    %1783 = vmatprep.subr.mxu0 0.0
    %v1784 = vand.u32 %v82, 4294901760
    %1785 = vmatpush1.msra.mxu0 %v1784
    %1786 = vmatprep.subr.mxu0 0.0
    %v1787 = vand.u32 %v83, 4294901760
    %1788 = vmatpush1.msra.mxu0 %v1787
    %1789 = vmatprep.subr.mxu0 0.0
    %v1790 = vand.u32 %v84, 4294901760
    %1791 = vmatpush1.msra.mxu0 %v1790
    %1792 = vmatprep.subr.mxu0 0.0
    %v1793 = vand.u32 %v85, 4294901760
    %1794 = vmatpush1.msra.mxu0 %v1793
    %1795 = vmatprep.subr.mxu0 0.0
    %v1796 = vand.u32 %v86, 4294901760
    %1797 = vmatpush1.msra.mxu0 %v1796
    %1798 = vmatprep.subr.mxu0 0.0
    %v1799 = vand.u32 %v87, 4294901760
    %1800 = vmatpush1.msra.mxu0 %v1799
    %1801 = vmatprep.subr.mxu0 0.0
    %v1802 = vand.u32 %v88, 4294901760
    %1803 = vmatpush1.msra.mxu0 %v1802
    %1804 = vmatprep.subr.mxu0 0.0
    %v1805 = vand.u32 %v89, 4294901760
    %1806 = vmatpush1.msra.mxu0 %v1805
    %1807 = vmatprep.subr.mxu0 0.0
    %v1808 = vand.u32 %v90, 4294901760
    %1809 = vmatpush1.msra.mxu0 %v1808
    %1810 = vmatprep.subr.mxu0 0.0
    %v1811 = vand.u32 %v91, 4294901760
    %1812 = vmatpush1.msra.mxu0 %v1811
    %1813 = vmatprep.subr.mxu0 0.0
    %v1814 = vand.u32 %v92, 4294901760
    %1815 = vmatpush1.msra.mxu0 %v1814
    %1816 = vmatprep.subr.mxu0 0.0
    %v1817 = vand.u32 %v93, 4294901760
    %1818 = vmatpush1.msra.mxu0 %v1817
    %1819 = vmatprep.subr.mxu0 0.0
    %v1820 = vand.u32 %v94, 4294901760
    %1821 = vmatpush1.msra.mxu0 %v1820
    %1822 = vmatprep.subr.mxu0 0.0
    %v1823 = vand.u32 %v95, 4294901760
    %1824 = vmatpush1.msra.mxu0 %v1823
    %1825 = vmatprep.subr.mxu0 0.0
    %v1826 = vand.u32 %v96, 4294901760
    %1827 = vmatpush1.msra.mxu0 %v1826
    %1828 = vmatprep.subr.mxu0 0.0
    %v1829 = vand.u32 %v97, 4294901760
    %1830 = vmatpush1.msra.mxu0 %v1829
    %1831 = vmatprep.subr.mxu0 0.0
    %v1832 = vand.u32 %v98, 4294901760
    %1833 = vmatpush1.msra.mxu0 %v1832
    %1834 = vmatprep.subr.mxu0 0.0
    %v1835 = vand.u32 %v99, 4294901760
    %1836 = vmatpush1.msra.mxu0 %v1835
    %1837 = vmatprep.subr.mxu0 0.0
    %v1838 = vand.u32 %v100, 4294901760
    %1839 = vmatpush1.msra.mxu0 %v1838
    %1840 = vmatprep.subr.mxu0 0.0
    %v1841 = vand.u32 %v101, 4294901760
    %1842 = vmatpush1.msra.mxu0 %v1841
    %1843 = vmatprep.subr.mxu0 0.0
    %v1844 = vand.u32 %v102, 4294901760
    %1845 = vmatpush1.msra.mxu0 %v1844
    %1846 = vmatprep.subr.mxu0 0.0
    %v1847 = vand.u32 %v103, 4294901760
    %1848 = vmatpush1.msra.mxu0 %v1847
    %1849 = vmatprep.subr.mxu0 0.0
    %v1850 = vand.u32 %v104, 4294901760
    %1851 = vmatpush1.msra.mxu0 %v1850
    %1852 = vmatprep.subr.mxu0 0.0
    %v1853 = vand.u32 %v105, 4294901760
    %1854 = vmatpush1.msra.mxu0 %v1853
    %1855 = vmatprep.subr.mxu0 0.0
    %v1856 = vand.u32 %v106, 4294901760
    %1857 = vmatpush1.msra.mxu0 %v1856
    %1858 = vmatprep.subr.mxu0 0.0
    %v1859 = vand.u32 %v107, 4294901760
    %1860 = vmatpush1.msra.mxu0 %v1859
    %1861 = vmatprep.subr.mxu0 0.0
    %v1862 = vand.u32 %v108, 4294901760
    %1863 = vmatpush1.msra.mxu0 %v1862
    %1864 = vmatprep.subr.mxu0 0.0
    %v1865 = vand.u32 %v109, 4294901760
    %1866 = vmatpush1.msra.mxu0 %v1865
    %1867 = vmatprep.subr.mxu0 0.0
    %v1868 = vand.u32 %v110, 4294901760
    %1869 = vmatpush1.msra.mxu0 %v1868
    %1870 = vmatprep.subr.mxu0 0.0
    %v1871 = vand.u32 %v111, 4294901760
    %1872 = vmatpush1.msra.mxu0 %v1871
    %v1873 = vand.u32 %v44, 4294901760
    %1874 = vmatprep.mubr.f32.mxu0 %v1873
    %v1875 = vand.u32 %v43, 4294901760
    %1876 = vmatmul.mubr.f32.gmra.mrb[0].mxu0 %v1875
    %v1877 = vpop.f32.mrb[0].mxu0
    %v1878 = vadd.f32 %v1774, %v1877
    %v1879 = vpop.f32.mrb[0].mxu0
    %1880 = vdwg.mxu0
    %1881 = vmatprep.subr.mxu0 0.0
    %v1882 = vand.u32 %v112, 4294901760
    %1883 = vmatpush1.msra.mxu0 %v1882
    %1884 = vmatprep.subr.mxu0 0.0
    %v1885 = vand.u32 %v113, 4294901760
    %1886 = vmatpush1.msra.mxu0 %v1885
    %1887 = vmatprep.subr.mxu0 0.0
    %v1888 = vand.u32 %v114, 4294901760
    %1889 = vmatpush1.msra.mxu0 %v1888
    %1890 = vmatprep.subr.mxu0 0.0
    %v1891 = vand.u32 %v115, 4294901760
    %1892 = vmatpush1.msra.mxu0 %v1891
    %1893 = vmatprep.subr.mxu0 0.0
    %v1894 = vand.u32 %v116, 4294901760
    %1895 = vmatpush1.msra.mxu0 %v1894
    %1896 = vmatprep.subr.mxu0 0.0
    %v1897 = vand.u32 %v117, 4294901760
    %1898 = vmatpush1.msra.mxu0 %v1897
    %1899 = vmatprep.subr.mxu0 0.0
    %v1900 = vand.u32 %v118, 4294901760
    %1901 = vmatpush1.msra.mxu0 %v1900
    %1902 = vmatprep.subr.mxu0 0.0
    %v1903 = vand.u32 %v119, 4294901760
    %1904 = vmatpush1.msra.mxu0 %v1903
    %1905 = vmatprep.subr.mxu0 0.0
    %v1906 = vand.u32 %v120, 4294901760
    %1907 = vmatpush1.msra.mxu0 %v1906
    %1908 = vmatprep.subr.mxu0 0.0
    %v1909 = vand.u32 %v121, 4294901760
    %1910 = vmatpush1.msra.mxu0 %v1909
    %1911 = vmatprep.subr.mxu0 0.0
    %v1912 = vand.u32 %v122, 4294901760
    %1913 = vmatpush1.msra.mxu0 %v1912
    %1914 = vmatprep.subr.mxu0 0.0
    %v1915 = vand.u32 %v123, 4294901760
    %1916 = vmatpush1.msra.mxu0 %v1915
    %1917 = vmatprep.subr.mxu0 0.0
    %v1918 = vand.u32 %v124, 4294901760
    %1919 = vmatpush1.msra.mxu0 %v1918
    %1920 = vmatprep.subr.mxu0 0.0
    %v1921 = vand.u32 %v125, 4294901760
    %1922 = vmatpush1.msra.mxu0 %v1921
    %1923 = vmatprep.subr.mxu0 0.0
    %v1924 = vand.u32 %v126, 4294901760
    %1925 = vmatpush1.msra.mxu0 %v1924
    %1926 = vmatprep.subr.mxu0 0.0
    %v1927 = vand.u32 %v127, 4294901760
    %1928 = vmatpush1.msra.mxu0 %v1927
    %1929 = vmatprep.subr.mxu0 0.0
    %v1930 = vand.u32 %v128, 4294901760
    %1931 = vmatpush1.msra.mxu0 %v1930
    %1932 = vmatprep.subr.mxu0 0.0
    %v1933 = vand.u32 %v129, 4294901760
    %1934 = vmatpush1.msra.mxu0 %v1933
    %1935 = vmatprep.subr.mxu0 0.0
    %v1936 = vand.u32 %v130, 4294901760
    %1937 = vmatpush1.msra.mxu0 %v1936
    %1938 = vmatprep.subr.mxu0 0.0
    %v1939 = vand.u32 %v131, 4294901760
    %1940 = vmatpush1.msra.mxu0 %v1939
    %1941 = vmatprep.subr.mxu0 0.0
    %v1942 = vand.u32 %v132, 4294901760
    %1943 = vmatpush1.msra.mxu0 %v1942
    %1944 = vmatprep.subr.mxu0 0.0
    %v1945 = vand.u32 %v133, 4294901760
    %1946 = vmatpush1.msra.mxu0 %v1945
    %1947 = vmatprep.subr.mxu0 0.0
    %v1948 = vand.u32 %v134, 4294901760
    %1949 = vmatpush1.msra.mxu0 %v1948
    %1950 = vmatprep.subr.mxu0 0.0
    %v1951 = vand.u32 %v135, 4294901760
    %1952 = vmatpush1.msra.mxu0 %v1951
    %1953 = vmatprep.subr.mxu0 0.0
    %v1954 = vand.u32 %v136, 4294901760
    %1955 = vmatpush1.msra.mxu0 %v1954
    %1956 = vmatprep.subr.mxu0 0.0
    %v1957 = vand.u32 %v137, 4294901760
    %1958 = vmatpush1.msra.mxu0 %v1957
    %1959 = vmatprep.subr.mxu0 0.0
    %v1960 = vand.u32 %v138, 4294901760
    %1961 = vmatpush1.msra.mxu0 %v1960
    %1962 = vmatprep.subr.mxu0 0.0
    %v1963 = vand.u32 %v139, 4294901760
    %1964 = vmatpush1.msra.mxu0 %v1963
    %1965 = vmatprep.subr.mxu0 0.0
    %v1966 = vand.u32 %v140, 4294901760
    %1967 = vmatpush1.msra.mxu0 %v1966
    %1968 = vmatprep.subr.mxu0 0.0
    %v1969 = vand.u32 %v141, 4294901760
    %1970 = vmatpush1.msra.mxu0 %v1969
    %1971 = vmatprep.subr.mxu0 0.0
    %v1972 = vand.u32 %v142, 4294901760
    %1973 = vmatpush1.msra.mxu0 %v1972
    %1974 = vmatprep.subr.mxu0 0.0
    %v1975 = vand.u32 %v143, 4294901760
    %1976 = vmatpush1.msra.mxu0 %v1975
    %v1977 = vand.u32 %v46, 4294901760
    %v1978 = vsub.f32 %v46, %v1977
    %v1979 = vand.u32 %v1978, 4294901760
    %v1980 = vsub.f32 %v1978, %v1979
    %v1981 = vand.u32 %v1980, 4294901760
    %1982 = vmatprep.mubr.f32.mxu0 %v1981
    %v1983 = vand.u32 %v45, 4294901760
    %v1984 = vsub.f32 %v45, %v1983
    %v1985 = vand.u32 %v1984, 4294901760
    %v1986 = vsub.f32 %v1984, %v1985
    %v1987 = vand.u32 %v1986, 4294901760
    %1988 = vmatmul.mubr.f32.gmra.mrb[0].mxu0 %v1987
    %v1989 = vpop.f32.mrb[0].mxu0
    %v1990 = vadd.f32 %v1878, %v1989
    %v1991 = vpop.f32.mrb[0].mxu0
    %1992 = vdwg.mxu0
    %1993 = vmatprep.subr.mxu0 0.0
    %v1994 = vand.u32 %v112, 4294901760
    %v1995 = vsub.f32 %v112, %v1994
    %v1996 = vand.u32 %v1995, 4294901760
    %v1997 = vsub.f32 %v1995, %v1996
    %v1998 = vand.u32 %v1997, 4294901760
    %1999 = vmatpush1.msra.mxu0 %v1998
    %2000 = vmatprep.subr.mxu0 0.0
    %v2001 = vand.u32 %v113, 4294901760
    %v2002 = vsub.f32 %v113, %v2001
    %v2003 = vand.u32 %v2002, 4294901760
    %v2004 = vsub.f32 %v2002, %v2003
    %v2005 = vand.u32 %v2004, 4294901760
    %2006 = vmatpush1.msra.mxu0 %v2005
    %2007 = vmatprep.subr.mxu0 0.0
    %v2008 = vand.u32 %v114, 4294901760
    %v2009 = vsub.f32 %v114, %v2008
    %v2010 = vand.u32 %v2009, 4294901760
    %v2011 = vsub.f32 %v2009, %v2010
    %v2012 = vand.u32 %v2011, 4294901760
    %2013 = vmatpush1.msra.mxu0 %v2012
    %2014 = vmatprep.subr.mxu0 0.0
    %v2015 = vand.u32 %v115, 4294901760
    %v2016 = vsub.f32 %v115, %v2015
    %v2017 = vand.u32 %v2016, 4294901760
    %v2018 = vsub.f32 %v2016, %v2017
    %v2019 = vand.u32 %v2018, 4294901760
    %2020 = vmatpush1.msra.mxu0 %v2019
    %2021 = vmatprep.subr.mxu0 0.0
    %v2022 = vand.u32 %v116, 4294901760
    %v2023 = vsub.f32 %v116, %v2022
    %v2024 = vand.u32 %v2023, 4294901760
    %v2025 = vsub.f32 %v2023, %v2024
    %v2026 = vand.u32 %v2025, 4294901760
    %2027 = vmatpush1.msra.mxu0 %v2026
    %2028 = vmatprep.subr.mxu0 0.0
    %v2029 = vand.u32 %v117, 4294901760
    %v2030 = vsub.f32 %v117, %v2029
    %v2031 = vand.u32 %v2030, 4294901760
    %v2032 = vsub.f32 %v2030, %v2031
    %v2033 = vand.u32 %v2032, 4294901760
    %2034 = vmatpush1.msra.mxu0 %v2033
    %2035 = vmatprep.subr.mxu0 0.0
    %v2036 = vand.u32 %v118, 4294901760
    %v2037 = vsub.f32 %v118, %v2036
    %v2038 = vand.u32 %v2037, 4294901760
    %v2039 = vsub.f32 %v2037, %v2038
    %v2040 = vand.u32 %v2039, 4294901760
    %2041 = vmatpush1.msra.mxu0 %v2040
    %2042 = vmatprep.subr.mxu0 0.0
    %v2043 = vand.u32 %v119, 4294901760
    %v2044 = vsub.f32 %v119, %v2043
    %v2045 = vand.u32 %v2044, 4294901760
    %v2046 = vsub.f32 %v2044, %v2045
    %v2047 = vand.u32 %v2046, 4294901760
    %2048 = vmatpush1.msra.mxu0 %v2047
    %2049 = vmatprep.subr.mxu0 0.0
    %v2050 = vand.u32 %v120, 4294901760
    %v2051 = vsub.f32 %v120, %v2050
    %v2052 = vand.u32 %v2051, 4294901760
    %v2053 = vsub.f32 %v2051, %v2052
    %v2054 = vand.u32 %v2053, 4294901760
    %2055 = vmatpush1.msra.mxu0 %v2054
    %2056 = vmatprep.subr.mxu0 0.0
    %v2057 = vand.u32 %v121, 4294901760
    %v2058 = vsub.f32 %v121, %v2057
    %v2059 = vand.u32 %v2058, 4294901760
    %v2060 = vsub.f32 %v2058, %v2059
    %v2061 = vand.u32 %v2060, 4294901760
    %2062 = vmatpush1.msra.mxu0 %v2061
    %2063 = vmatprep.subr.mxu0 0.0
    %v2064 = vand.u32 %v122, 4294901760
    %v2065 = vsub.f32 %v122, %v2064
    %v2066 = vand.u32 %v2065, 4294901760
    %v2067 = vsub.f32 %v2065, %v2066
    %v2068 = vand.u32 %v2067, 4294901760
    %2069 = vmatpush1.msra.mxu0 %v2068
    %2070 = vmatprep.subr.mxu0 0.0
    %v2071 = vand.u32 %v123, 4294901760
    %v2072 = vsub.f32 %v123, %v2071
    %v2073 = vand.u32 %v2072, 4294901760
    %v2074 = vsub.f32 %v2072, %v2073
    %v2075 = vand.u32 %v2074, 4294901760
    %2076 = vmatpush1.msra.mxu0 %v2075
    %2077 = vmatprep.subr.mxu0 0.0
    %v2078 = vand.u32 %v124, 4294901760
    %v2079 = vsub.f32 %v124, %v2078
    %v2080 = vand.u32 %v2079, 4294901760
    %v2081 = vsub.f32 %v2079, %v2080
    %v2082 = vand.u32 %v2081, 4294901760
    %2083 = vmatpush1.msra.mxu0 %v2082
    %2084 = vmatprep.subr.mxu0 0.0
    %v2085 = vand.u32 %v125, 4294901760
    %v2086 = vsub.f32 %v125, %v2085
    %v2087 = vand.u32 %v2086, 4294901760
    %v2088 = vsub.f32 %v2086, %v2087
    %v2089 = vand.u32 %v2088, 4294901760
    %2090 = vmatpush1.msra.mxu0 %v2089
    %2091 = vmatprep.subr.mxu0 0.0
    %v2092 = vand.u32 %v126, 4294901760
    %v2093 = vsub.f32 %v126, %v2092
    %v2094 = vand.u32 %v2093, 4294901760
    %v2095 = vsub.f32 %v2093, %v2094
    %v2096 = vand.u32 %v2095, 4294901760
    %2097 = vmatpush1.msra.mxu0 %v2096
    %2098 = vmatprep.subr.mxu0 0.0
    %v2099 = vand.u32 %v127, 4294901760
    %v2100 = vsub.f32 %v127, %v2099
    %v2101 = vand.u32 %v2100, 4294901760
    %v2102 = vsub.f32 %v2100, %v2101
    %v2103 = vand.u32 %v2102, 4294901760
    %2104 = vmatpush1.msra.mxu0 %v2103
    %2105 = vmatprep.subr.mxu0 0.0
    %v2106 = vand.u32 %v128, 4294901760
    %v2107 = vsub.f32 %v128, %v2106
    %v2108 = vand.u32 %v2107, 4294901760
    %v2109 = vsub.f32 %v2107, %v2108
    %v2110 = vand.u32 %v2109, 4294901760
    %2111 = vmatpush1.msra.mxu0 %v2110
    %2112 = vmatprep.subr.mxu0 0.0
    %v2113 = vand.u32 %v129, 4294901760
    %v2114 = vsub.f32 %v129, %v2113
    %v2115 = vand.u32 %v2114, 4294901760
    %v2116 = vsub.f32 %v2114, %v2115
    %v2117 = vand.u32 %v2116, 4294901760
    %2118 = vmatpush1.msra.mxu0 %v2117
    %2119 = vmatprep.subr.mxu0 0.0
    %v2120 = vand.u32 %v130, 4294901760
    %v2121 = vsub.f32 %v130, %v2120
    %v2122 = vand.u32 %v2121, 4294901760
    %v2123 = vsub.f32 %v2121, %v2122
    %v2124 = vand.u32 %v2123, 4294901760
    %2125 = vmatpush1.msra.mxu0 %v2124
    %2126 = vmatprep.subr.mxu0 0.0
    %v2127 = vand.u32 %v131, 4294901760
    %v2128 = vsub.f32 %v131, %v2127
    %v2129 = vand.u32 %v2128, 4294901760
    %v2130 = vsub.f32 %v2128, %v2129
    %v2131 = vand.u32 %v2130, 4294901760
    %2132 = vmatpush1.msra.mxu0 %v2131
    %2133 = vmatprep.subr.mxu0 0.0
    %v2134 = vand.u32 %v132, 4294901760
    %v2135 = vsub.f32 %v132, %v2134
    %v2136 = vand.u32 %v2135, 4294901760
    %v2137 = vsub.f32 %v2135, %v2136
    %v2138 = vand.u32 %v2137, 4294901760
    %2139 = vmatpush1.msra.mxu0 %v2138
    %2140 = vmatprep.subr.mxu0 0.0
    %v2141 = vand.u32 %v133, 4294901760
    %v2142 = vsub.f32 %v133, %v2141
    %v2143 = vand.u32 %v2142, 4294901760
    %v2144 = vsub.f32 %v2142, %v2143
    %v2145 = vand.u32 %v2144, 4294901760
    %2146 = vmatpush1.msra.mxu0 %v2145
    %2147 = vmatprep.subr.mxu0 0.0
    %v2148 = vand.u32 %v134, 4294901760
    %v2149 = vsub.f32 %v134, %v2148
    %v2150 = vand.u32 %v2149, 4294901760
    %v2151 = vsub.f32 %v2149, %v2150
    %v2152 = vand.u32 %v2151, 4294901760
    %2153 = vmatpush1.msra.mxu0 %v2152
    %2154 = vmatprep.subr.mxu0 0.0
    %v2155 = vand.u32 %v135, 4294901760
    %v2156 = vsub.f32 %v135, %v2155
    %v2157 = vand.u32 %v2156, 4294901760
    %v2158 = vsub.f32 %v2156, %v2157
    %v2159 = vand.u32 %v2158, 4294901760
    %2160 = vmatpush1.msra.mxu0 %v2159
    %2161 = vmatprep.subr.mxu0 0.0
    %v2162 = vand.u32 %v136, 4294901760
    %v2163 = vsub.f32 %v136, %v2162
    %v2164 = vand.u32 %v2163, 4294901760
    %v2165 = vsub.f32 %v2163, %v2164
    %v2166 = vand.u32 %v2165, 4294901760
    %2167 = vmatpush1.msra.mxu0 %v2166
    %2168 = vmatprep.subr.mxu0 0.0
    %v2169 = vand.u32 %v137, 4294901760
    %v2170 = vsub.f32 %v137, %v2169
    %v2171 = vand.u32 %v2170, 4294901760
    %v2172 = vsub.f32 %v2170, %v2171
    %v2173 = vand.u32 %v2172, 4294901760
    %2174 = vmatpush1.msra.mxu0 %v2173
    %2175 = vmatprep.subr.mxu0 0.0
    %v2176 = vand.u32 %v138, 4294901760
    %v2177 = vsub.f32 %v138, %v2176
    %v2178 = vand.u32 %v2177, 4294901760
    %v2179 = vsub.f32 %v2177, %v2178
    %v2180 = vand.u32 %v2179, 4294901760
    %2181 = vmatpush1.msra.mxu0 %v2180
    %2182 = vmatprep.subr.mxu0 0.0
    %v2183 = vand.u32 %v139, 4294901760
    %v2184 = vsub.f32 %v139, %v2183
    %v2185 = vand.u32 %v2184, 4294901760
    %v2186 = vsub.f32 %v2184, %v2185
    %v2187 = vand.u32 %v2186, 4294901760
    %2188 = vmatpush1.msra.mxu0 %v2187
    %2189 = vmatprep.subr.mxu0 0.0
    %v2190 = vand.u32 %v140, 4294901760
    %v2191 = vsub.f32 %v140, %v2190
    %v2192 = vand.u32 %v2191, 4294901760
    %v2193 = vsub.f32 %v2191, %v2192
    %v2194 = vand.u32 %v2193, 4294901760
    %2195 = vmatpush1.msra.mxu0 %v2194
    %2196 = vmatprep.subr.mxu0 0.0
    %v2197 = vand.u32 %v141, 4294901760
    %v2198 = vsub.f32 %v141, %v2197
    %v2199 = vand.u32 %v2198, 4294901760
    %v2200 = vsub.f32 %v2198, %v2199
    %v2201 = vand.u32 %v2200, 4294901760
    %2202 = vmatpush1.msra.mxu0 %v2201
    %2203 = vmatprep.subr.mxu0 0.0
    %v2204 = vand.u32 %v142, 4294901760
    %v2205 = vsub.f32 %v142, %v2204
    %v2206 = vand.u32 %v2205, 4294901760
    %v2207 = vsub.f32 %v2205, %v2206
    %v2208 = vand.u32 %v2207, 4294901760
    %2209 = vmatpush1.msra.mxu0 %v2208
    %2210 = vmatprep.subr.mxu0 0.0
    %v2211 = vand.u32 %v143, 4294901760
    %v2212 = vsub.f32 %v143, %v2211
    %v2213 = vand.u32 %v2212, 4294901760
    %v2214 = vsub.f32 %v2212, %v2213
    %v2215 = vand.u32 %v2214, 4294901760
    %2216 = vmatpush1.msra.mxu0 %v2215
    %v2217 = vand.u32 %v46, 4294901760
    %2218 = vmatprep.mubr.f32.mxu0 %v2217
    %v2219 = vand.u32 %v45, 4294901760
    %2220 = vmatmul.mubr.f32.gmra.mrb[0].mxu0 %v2219
    %v2221 = vpop.f32.mrb[0].mxu0
    %v2222 = vadd.f32 %v1990, %v2221
    %v2223 = vpop.f32.mrb[0].mxu0
    %2224 = vdwg.mxu0
    %2225 = vmatprep.subr.mxu0 0.0
    %v2226 = vand.u32 %v112, 4294901760
    %v2227 = vsub.f32 %v112, %v2226
    %2228 = vmatpush1.msra.mxu0 %v2227
    %2229 = vmatprep.subr.mxu0 0.0
    %v2230 = vand.u32 %v113, 4294901760
    %v2231 = vsub.f32 %v113, %v2230
    %2232 = vmatpush1.msra.mxu0 %v2231
    %2233 = vmatprep.subr.mxu0 0.0
    %v2234 = vand.u32 %v114, 4294901760
    %v2235 = vsub.f32 %v114, %v2234
    %2236 = vmatpush1.msra.mxu0 %v2235
    %2237 = vmatprep.subr.mxu0 0.0
    %v2238 = vand.u32 %v115, 4294901760
    %v2239 = vsub.f32 %v115, %v2238
    %2240 = vmatpush1.msra.mxu0 %v2239
    %2241 = vmatprep.subr.mxu0 0.0
    %v2242 = vand.u32 %v116, 4294901760
    %v2243 = vsub.f32 %v116, %v2242
    %2244 = vmatpush1.msra.mxu0 %v2243
    %2245 = vmatprep.subr.mxu0 0.0
    %v2246 = vand.u32 %v117, 4294901760
    %v2247 = vsub.f32 %v117, %v2246
    %2248 = vmatpush1.msra.mxu0 %v2247
    %2249 = vmatprep.subr.mxu0 0.0
    %v2250 = vand.u32 %v118, 4294901760
    %v2251 = vsub.f32 %v118, %v2250
    %2252 = vmatpush1.msra.mxu0 %v2251
    %2253 = vmatprep.subr.mxu0 0.0
    %v2254 = vand.u32 %v119, 4294901760
    %v2255 = vsub.f32 %v119, %v2254
    %2256 = vmatpush1.msra.mxu0 %v2255
    %2257 = vmatprep.subr.mxu0 0.0
    %v2258 = vand.u32 %v120, 4294901760
    %v2259 = vsub.f32 %v120, %v2258
    %2260 = vmatpush1.msra.mxu0 %v2259
    %2261 = vmatprep.subr.mxu0 0.0
    %v2262 = vand.u32 %v121, 4294901760
    %v2263 = vsub.f32 %v121, %v2262
    %2264 = vmatpush1.msra.mxu0 %v2263
    %2265 = vmatprep.subr.mxu0 0.0
    %v2266 = vand.u32 %v122, 4294901760
    %v2267 = vsub.f32 %v122, %v2266
    %2268 = vmatpush1.msra.mxu0 %v2267
    %2269 = vmatprep.subr.mxu0 0.0
    %v2270 = vand.u32 %v123, 4294901760
    %v2271 = vsub.f32 %v123, %v2270
    %2272 = vmatpush1.msra.mxu0 %v2271
    %2273 = vmatprep.subr.mxu0 0.0
    %v2274 = vand.u32 %v124, 4294901760
    %v2275 = vsub.f32 %v124, %v2274
    %2276 = vmatpush1.msra.mxu0 %v2275
    %2277 = vmatprep.subr.mxu0 0.0
    %v2278 = vand.u32 %v125, 4294901760
    %v2279 = vsub.f32 %v125, %v2278
    %2280 = vmatpush1.msra.mxu0 %v2279
    %2281 = vmatprep.subr.mxu0 0.0
    %v2282 = vand.u32 %v126, 4294901760
    %v2283 = vsub.f32 %v126, %v2282
    %2284 = vmatpush1.msra.mxu0 %v2283
    %2285 = vmatprep.subr.mxu0 0.0
    %v2286 = vand.u32 %v127, 4294901760
    %v2287 = vsub.f32 %v127, %v2286
    %2288 = vmatpush1.msra.mxu0 %v2287
    %2289 = vmatprep.subr.mxu0 0.0
    %v2290 = vand.u32 %v128, 4294901760
    %v2291 = vsub.f32 %v128, %v2290
    %2292 = vmatpush1.msra.mxu0 %v2291
    %2293 = vmatprep.subr.mxu0 0.0
    %v2294 = vand.u32 %v129, 4294901760
    %v2295 = vsub.f32 %v129, %v2294
    %2296 = vmatpush1.msra.mxu0 %v2295
    %2297 = vmatprep.subr.mxu0 0.0
    %v2298 = vand.u32 %v130, 4294901760
    %v2299 = vsub.f32 %v130, %v2298
    %2300 = vmatpush1.msra.mxu0 %v2299
    %2301 = vmatprep.subr.mxu0 0.0
    %v2302 = vand.u32 %v131, 4294901760
    %v2303 = vsub.f32 %v131, %v2302
    %2304 = vmatpush1.msra.mxu0 %v2303
    %2305 = vmatprep.subr.mxu0 0.0
    %v2306 = vand.u32 %v132, 4294901760
    %v2307 = vsub.f32 %v132, %v2306
    %2308 = vmatpush1.msra.mxu0 %v2307
    %2309 = vmatprep.subr.mxu0 0.0
    %v2310 = vand.u32 %v133, 4294901760
    %v2311 = vsub.f32 %v133, %v2310
    %2312 = vmatpush1.msra.mxu0 %v2311
    %2313 = vmatprep.subr.mxu0 0.0
    %v2314 = vand.u32 %v134, 4294901760
    %v2315 = vsub.f32 %v134, %v2314
    %2316 = vmatpush1.msra.mxu0 %v2315
    %2317 = vmatprep.subr.mxu0 0.0
    %v2318 = vand.u32 %v135, 4294901760
    %v2319 = vsub.f32 %v135, %v2318
    %2320 = vmatpush1.msra.mxu0 %v2319
    %2321 = vmatprep.subr.mxu0 0.0
    %v2322 = vand.u32 %v136, 4294901760
    %v2323 = vsub.f32 %v136, %v2322
    %2324 = vmatpush1.msra.mxu0 %v2323
    %2325 = vmatprep.subr.mxu0 0.0
    %v2326 = vand.u32 %v137, 4294901760
    %v2327 = vsub.f32 %v137, %v2326
    %2328 = vmatpush1.msra.mxu0 %v2327
    %2329 = vmatprep.subr.mxu0 0.0
    %v2330 = vand.u32 %v138, 4294901760
    %v2331 = vsub.f32 %v138, %v2330
    %2332 = vmatpush1.msra.mxu0 %v2331
    %2333 = vmatprep.subr.mxu0 0.0
    %v2334 = vand.u32 %v139, 4294901760
    %v2335 = vsub.f32 %v139, %v2334
    %2336 = vmatpush1.msra.mxu0 %v2335
    %2337 = vmatprep.subr.mxu0 0.0
    %v2338 = vand.u32 %v140, 4294901760
    %v2339 = vsub.f32 %v140, %v2338
    %2340 = vmatpush1.msra.mxu0 %v2339
    %2341 = vmatprep.subr.mxu0 0.0
    %v2342 = vand.u32 %v141, 4294901760
    %v2343 = vsub.f32 %v141, %v2342
    %2344 = vmatpush1.msra.mxu0 %v2343
    %2345 = vmatprep.subr.mxu0 0.0
    %v2346 = vand.u32 %v142, 4294901760
    %v2347 = vsub.f32 %v142, %v2346
    %2348 = vmatpush1.msra.mxu0 %v2347
    %2349 = vmatprep.subr.mxu0 0.0
    %v2350 = vand.u32 %v143, 4294901760
    %v2351 = vsub.f32 %v143, %v2350
    %2352 = vmatpush1.msra.mxu0 %v2351
    %v2353 = vand.u32 %v46, 4294901760
    %v2354 = vsub.f32 %v46, %v2353
    %2355 = vmatprep.mubr.f32.mxu0 %v2354
    %v2356 = vand.u32 %v45, 4294901760
    %v2357 = vsub.f32 %v45, %v2356
    %2358 = vmatmul.mubr.f32.gmra.mrb[0].mxu0 %v2357
    %v2359 = vpop.f32.mrb[0].mxu0
    %v2360 = vadd.f32 %v2222, %v2359
    %v2361 = vpop.f32.mrb[0].mxu0
    %2362 = vdwg.mxu0
    %2363 = vmatprep.subr.mxu0 0.0
    %v2364 = vand.u32 %v112, 4294901760
    %2365 = vmatpush1.msra.mxu0 %v2364
    %2366 = vmatprep.subr.mxu0 0.0
    %v2367 = vand.u32 %v113, 4294901760
    %2368 = vmatpush1.msra.mxu0 %v2367
    %2369 = vmatprep.subr.mxu0 0.0
    %v2370 = vand.u32 %v114, 4294901760
    %2371 = vmatpush1.msra.mxu0 %v2370
    %2372 = vmatprep.subr.mxu0 0.0
    %v2373 = vand.u32 %v115, 4294901760
    %2374 = vmatpush1.msra.mxu0 %v2373
    %2375 = vmatprep.subr.mxu0 0.0
    %v2376 = vand.u32 %v116, 4294901760
    %2377 = vmatpush1.msra.mxu0 %v2376
    %2378 = vmatprep.subr.mxu0 0.0
    %v2379 = vand.u32 %v117, 4294901760
    %2380 = vmatpush1.msra.mxu0 %v2379
    %2381 = vmatprep.subr.mxu0 0.0
    %v2382 = vand.u32 %v118, 4294901760
    %2383 = vmatpush1.msra.mxu0 %v2382
    %2384 = vmatprep.subr.mxu0 0.0
    %v2385 = vand.u32 %v119, 4294901760
    %2386 = vmatpush1.msra.mxu0 %v2385
    %2387 = vmatprep.subr.mxu0 0.0
    %v2388 = vand.u32 %v120, 4294901760
    %2389 = vmatpush1.msra.mxu0 %v2388
    %2390 = vmatprep.subr.mxu0 0.0
    %v2391 = vand.u32 %v121, 4294901760
    %2392 = vmatpush1.msra.mxu0 %v2391
    %2393 = vmatprep.subr.mxu0 0.0
    %v2394 = vand.u32 %v122, 4294901760
    %2395 = vmatpush1.msra.mxu0 %v2394
    %2396 = vmatprep.subr.mxu0 0.0
    %v2397 = vand.u32 %v123, 4294901760
    %2398 = vmatpush1.msra.mxu0 %v2397
    %2399 = vmatprep.subr.mxu0 0.0
    %v2400 = vand.u32 %v124, 4294901760
    %2401 = vmatpush1.msra.mxu0 %v2400
    %2402 = vmatprep.subr.mxu0 0.0
    %v2403 = vand.u32 %v125, 4294901760
    %2404 = vmatpush1.msra.mxu0 %v2403
    %2405 = vmatprep.subr.mxu0 0.0
    %v2406 = vand.u32 %v126, 4294901760
    %2407 = vmatpush1.msra.mxu0 %v2406
    %2408 = vmatprep.subr.mxu0 0.0
    %v2409 = vand.u32 %v127, 4294901760
    %2410 = vmatpush1.msra.mxu0 %v2409
    %2411 = vmatprep.subr.mxu0 0.0
    %v2412 = vand.u32 %v128, 4294901760
    %2413 = vmatpush1.msra.mxu0 %v2412
    %2414 = vmatprep.subr.mxu0 0.0
    %v2415 = vand.u32 %v129, 4294901760
    %2416 = vmatpush1.msra.mxu0 %v2415
    %2417 = vmatprep.subr.mxu0 0.0
    %v2418 = vand.u32 %v130, 4294901760
    %2419 = vmatpush1.msra.mxu0 %v2418
    %2420 = vmatprep.subr.mxu0 0.0
    %v2421 = vand.u32 %v131, 4294901760
    %2422 = vmatpush1.msra.mxu0 %v2421
    %2423 = vmatprep.subr.mxu0 0.0
    %v2424 = vand.u32 %v132, 4294901760
    %2425 = vmatpush1.msra.mxu0 %v2424
    %2426 = vmatprep.subr.mxu0 0.0
    %v2427 = vand.u32 %v133, 4294901760
    %2428 = vmatpush1.msra.mxu0 %v2427
    %2429 = vmatprep.subr.mxu0 0.0
    %v2430 = vand.u32 %v134, 4294901760
    %2431 = vmatpush1.msra.mxu0 %v2430
    %2432 = vmatprep.subr.mxu0 0.0
    %v2433 = vand.u32 %v135, 4294901760
    %2434 = vmatpush1.msra.mxu0 %v2433
    %2435 = vmatprep.subr.mxu0 0.0
    %v2436 = vand.u32 %v136, 4294901760
    %2437 = vmatpush1.msra.mxu0 %v2436
    %2438 = vmatprep.subr.mxu0 0.0
    %v2439 = vand.u32 %v137, 4294901760
    %2440 = vmatpush1.msra.mxu0 %v2439
    %2441 = vmatprep.subr.mxu0 0.0
    %v2442 = vand.u32 %v138, 4294901760
    %2443 = vmatpush1.msra.mxu0 %v2442
    %2444 = vmatprep.subr.mxu0 0.0
    %v2445 = vand.u32 %v139, 4294901760
    %2446 = vmatpush1.msra.mxu0 %v2445
    %2447 = vmatprep.subr.mxu0 0.0
    %v2448 = vand.u32 %v140, 4294901760
    %2449 = vmatpush1.msra.mxu0 %v2448
    %2450 = vmatprep.subr.mxu0 0.0
    %v2451 = vand.u32 %v141, 4294901760
    %2452 = vmatpush1.msra.mxu0 %v2451
    %2453 = vmatprep.subr.mxu0 0.0
    %v2454 = vand.u32 %v142, 4294901760
    %2455 = vmatpush1.msra.mxu0 %v2454
    %2456 = vmatprep.subr.mxu0 0.0
    %v2457 = vand.u32 %v143, 4294901760
    %2458 = vmatpush1.msra.mxu0 %v2457
    %v2459 = vand.u32 %v46, 4294901760
    %v2460 = vsub.f32 %v46, %v2459
    %v2461 = vand.u32 %v2460, 4294901760
    %2462 = vmatprep.mubr.f32.mxu0 %v2461
    %v2463 = vand.u32 %v45, 4294901760
    %v2464 = vsub.f32 %v45, %v2463
    %v2465 = vand.u32 %v2464, 4294901760
    %2466 = vmatmul.mubr.f32.gmra.mrb[0].mxu0 %v2465
    %v2467 = vpop.f32.mrb[0].mxu0
    %v2468 = vadd.f32 %v2360, %v2467
    %v2469 = vpop.f32.mrb[0].mxu0
    %2470 = vdwg.mxu0
    %2471 = vmatprep.subr.mxu0 0.0
    %v2472 = vand.u32 %v112, 4294901760
    %v2473 = vsub.f32 %v112, %v2472
    %v2474 = vand.u32 %v2473, 4294901760
    %2475 = vmatpush1.msra.mxu0 %v2474
    %2476 = vmatprep.subr.mxu0 0.0
    %v2477 = vand.u32 %v113, 4294901760
    %v2478 = vsub.f32 %v113, %v2477
    %v2479 = vand.u32 %v2478, 4294901760
    %2480 = vmatpush1.msra.mxu0 %v2479
    %2481 = vmatprep.subr.mxu0 0.0
    %v2482 = vand.u32 %v114, 4294901760
    %v2483 = vsub.f32 %v114, %v2482
    %v2484 = vand.u32 %v2483, 4294901760
    %2485 = vmatpush1.msra.mxu0 %v2484
    %2486 = vmatprep.subr.mxu0 0.0
    %v2487 = vand.u32 %v115, 4294901760
    %v2488 = vsub.f32 %v115, %v2487
    %v2489 = vand.u32 %v2488, 4294901760
    %2490 = vmatpush1.msra.mxu0 %v2489
    %2491 = vmatprep.subr.mxu0 0.0
    %v2492 = vand.u32 %v116, 4294901760
    %v2493 = vsub.f32 %v116, %v2492
    %v2494 = vand.u32 %v2493, 4294901760
    %2495 = vmatpush1.msra.mxu0 %v2494
    %2496 = vmatprep.subr.mxu0 0.0
    %v2497 = vand.u32 %v117, 4294901760
    %v2498 = vsub.f32 %v117, %v2497
    %v2499 = vand.u32 %v2498, 4294901760
    %2500 = vmatpush1.msra.mxu0 %v2499
    %2501 = vmatprep.subr.mxu0 0.0
    %v2502 = vand.u32 %v118, 4294901760
    %v2503 = vsub.f32 %v118, %v2502
    %v2504 = vand.u32 %v2503, 4294901760
    %2505 = vmatpush1.msra.mxu0 %v2504
    %2506 = vmatprep.subr.mxu0 0.0
    %v2507 = vand.u32 %v119, 4294901760
    %v2508 = vsub.f32 %v119, %v2507
    %v2509 = vand.u32 %v2508, 4294901760
    %2510 = vmatpush1.msra.mxu0 %v2509
    %2511 = vmatprep.subr.mxu0 0.0
    %v2512 = vand.u32 %v120, 4294901760
    %v2513 = vsub.f32 %v120, %v2512
    %v2514 = vand.u32 %v2513, 4294901760
    %2515 = vmatpush1.msra.mxu0 %v2514
    %2516 = vmatprep.subr.mxu0 0.0
    %v2517 = vand.u32 %v121, 4294901760
    %v2518 = vsub.f32 %v121, %v2517
    %v2519 = vand.u32 %v2518, 4294901760
    %2520 = vmatpush1.msra.mxu0 %v2519
    %2521 = vmatprep.subr.mxu0 0.0
    %v2522 = vand.u32 %v122, 4294901760
    %v2523 = vsub.f32 %v122, %v2522
    %v2524 = vand.u32 %v2523, 4294901760
    %2525 = vmatpush1.msra.mxu0 %v2524
    %2526 = vmatprep.subr.mxu0 0.0
    %v2527 = vand.u32 %v123, 4294901760
    %v2528 = vsub.f32 %v123, %v2527
    %v2529 = vand.u32 %v2528, 4294901760
    %2530 = vmatpush1.msra.mxu0 %v2529
    %2531 = vmatprep.subr.mxu0 0.0
    %v2532 = vand.u32 %v124, 4294901760
    %v2533 = vsub.f32 %v124, %v2532
    %v2534 = vand.u32 %v2533, 4294901760
    %2535 = vmatpush1.msra.mxu0 %v2534
    %2536 = vmatprep.subr.mxu0 0.0
    %v2537 = vand.u32 %v125, 4294901760
    %v2538 = vsub.f32 %v125, %v2537
    %v2539 = vand.u32 %v2538, 4294901760
    %2540 = vmatpush1.msra.mxu0 %v2539
    %2541 = vmatprep.subr.mxu0 0.0
    %v2542 = vand.u32 %v126, 4294901760
    %v2543 = vsub.f32 %v126, %v2542
    %v2544 = vand.u32 %v2543, 4294901760
    %2545 = vmatpush1.msra.mxu0 %v2544
    %2546 = vmatprep.subr.mxu0 0.0
    %v2547 = vand.u32 %v127, 4294901760
    %v2548 = vsub.f32 %v127, %v2547
    %v2549 = vand.u32 %v2548, 4294901760
    %2550 = vmatpush1.msra.mxu0 %v2549
    %2551 = vmatprep.subr.mxu0 0.0
    %v2552 = vand.u32 %v128, 4294901760
    %v2553 = vsub.f32 %v128, %v2552
    %v2554 = vand.u32 %v2553, 4294901760
    %2555 = vmatpush1.msra.mxu0 %v2554
    %2556 = vmatprep.subr.mxu0 0.0
    %v2557 = vand.u32 %v129, 4294901760
    %v2558 = vsub.f32 %v129, %v2557
    %v2559 = vand.u32 %v2558, 4294901760
    %2560 = vmatpush1.msra.mxu0 %v2559
    %2561 = vmatprep.subr.mxu0 0.0
    %v2562 = vand.u32 %v130, 4294901760
    %v2563 = vsub.f32 %v130, %v2562
    %v2564 = vand.u32 %v2563, 4294901760
    %2565 = vmatpush1.msra.mxu0 %v2564
    %2566 = vmatprep.subr.mxu0 0.0
    %v2567 = vand.u32 %v131, 4294901760
    %v2568 = vsub.f32 %v131, %v2567
    %v2569 = vand.u32 %v2568, 4294901760
    %2570 = vmatpush1.msra.mxu0 %v2569
    %2571 = vmatprep.subr.mxu0 0.0
    %v2572 = vand.u32 %v132, 4294901760
    %v2573 = vsub.f32 %v132, %v2572
    %v2574 = vand.u32 %v2573, 4294901760
    %2575 = vmatpush1.msra.mxu0 %v2574
    %2576 = vmatprep.subr.mxu0 0.0
    %v2577 = vand.u32 %v133, 4294901760
    %v2578 = vsub.f32 %v133, %v2577
    %v2579 = vand.u32 %v2578, 4294901760
    %2580 = vmatpush1.msra.mxu0 %v2579
    %2581 = vmatprep.subr.mxu0 0.0
    %v2582 = vand.u32 %v134, 4294901760
    %v2583 = vsub.f32 %v134, %v2582
    %v2584 = vand.u32 %v2583, 4294901760
    %2585 = vmatpush1.msra.mxu0 %v2584
    %2586 = vmatprep.subr.mxu0 0.0
    %v2587 = vand.u32 %v135, 4294901760
    %v2588 = vsub.f32 %v135, %v2587
    %v2589 = vand.u32 %v2588, 4294901760
    %2590 = vmatpush1.msra.mxu0 %v2589
    %2591 = vmatprep.subr.mxu0 0.0
    %v2592 = vand.u32 %v136, 4294901760
    %v2593 = vsub.f32 %v136, %v2592
    %v2594 = vand.u32 %v2593, 4294901760
    %2595 = vmatpush1.msra.mxu0 %v2594
    %2596 = vmatprep.subr.mxu0 0.0
    %v2597 = vand.u32 %v137, 4294901760
    %v2598 = vsub.f32 %v137, %v2597
    %v2599 = vand.u32 %v2598, 4294901760
    %2600 = vmatpush1.msra.mxu0 %v2599
    %2601 = vmatprep.subr.mxu0 0.0
    %v2602 = vand.u32 %v138, 4294901760
    %v2603 = vsub.f32 %v138, %v2602
    %v2604 = vand.u32 %v2603, 4294901760
    %2605 = vmatpush1.msra.mxu0 %v2604
    %2606 = vmatprep.subr.mxu0 0.0
    %v2607 = vand.u32 %v139, 4294901760
    %v2608 = vsub.f32 %v139, %v2607
    %v2609 = vand.u32 %v2608, 4294901760
    %2610 = vmatpush1.msra.mxu0 %v2609
    %2611 = vmatprep.subr.mxu0 0.0
    %v2612 = vand.u32 %v140, 4294901760
    %v2613 = vsub.f32 %v140, %v2612
    %v2614 = vand.u32 %v2613, 4294901760
    %2615 = vmatpush1.msra.mxu0 %v2614
    %2616 = vmatprep.subr.mxu0 0.0
    %v2617 = vand.u32 %v141, 4294901760
    %v2618 = vsub.f32 %v141, %v2617
    %v2619 = vand.u32 %v2618, 4294901760
    %2620 = vmatpush1.msra.mxu0 %v2619
    %2621 = vmatprep.subr.mxu0 0.0
    %v2622 = vand.u32 %v142, 4294901760
    %v2623 = vsub.f32 %v142, %v2622
    %v2624 = vand.u32 %v2623, 4294901760
    %2625 = vmatpush1.msra.mxu0 %v2624
    %2626 = vmatprep.subr.mxu0 0.0
    %v2627 = vand.u32 %v143, 4294901760
    %v2628 = vsub.f32 %v143, %v2627
    %v2629 = vand.u32 %v2628, 4294901760
    %2630 = vmatpush1.msra.mxu0 %v2629
    %v2631 = vand.u32 %v46, 4294901760
    %2632 = vmatprep.mubr.f32.mxu0 %v2631
    %v2633 = vand.u32 %v45, 4294901760
    %2634 = vmatmul.mubr.f32.gmra.mrb[0].mxu0 %v2633
    %v2635 = vpop.f32.mrb[0].mxu0
    %v2636 = vadd.f32 %v2468, %v2635
    %v2637 = vpop.f32.mrb[0].mxu0
    %2638 = vdwg.mxu0
    %2639 = vmatprep.subr.mxu0 0.0
    %v2640 = vand.u32 %v112, 4294901760
    %2641 = vmatpush1.msra.mxu0 %v2640
    %2642 = vmatprep.subr.mxu0 0.0
    %v2643 = vand.u32 %v113, 4294901760
    %2644 = vmatpush1.msra.mxu0 %v2643
    %2645 = vmatprep.subr.mxu0 0.0
    %v2646 = vand.u32 %v114, 4294901760
    %2647 = vmatpush1.msra.mxu0 %v2646
    %2648 = vmatprep.subr.mxu0 0.0
    %v2649 = vand.u32 %v115, 4294901760
    %2650 = vmatpush1.msra.mxu0 %v2649
    %2651 = vmatprep.subr.mxu0 0.0
    %v2652 = vand.u32 %v116, 4294901760
    %2653 = vmatpush1.msra.mxu0 %v2652
    %2654 = vmatprep.subr.mxu0 0.0
    %v2655 = vand.u32 %v117, 4294901760
    %2656 = vmatpush1.msra.mxu0 %v2655
    %2657 = vmatprep.subr.mxu0 0.0
    %v2658 = vand.u32 %v118, 4294901760
    %2659 = vmatpush1.msra.mxu0 %v2658
    %2660 = vmatprep.subr.mxu0 0.0
    %v2661 = vand.u32 %v119, 4294901760
    %2662 = vmatpush1.msra.mxu0 %v2661
    %2663 = vmatprep.subr.mxu0 0.0
    %v2664 = vand.u32 %v120, 4294901760
    %2665 = vmatpush1.msra.mxu0 %v2664
    %2666 = vmatprep.subr.mxu0 0.0
    %v2667 = vand.u32 %v121, 4294901760
    %2668 = vmatpush1.msra.mxu0 %v2667
    %2669 = vmatprep.subr.mxu0 0.0
    %v2670 = vand.u32 %v122, 4294901760
    %2671 = vmatpush1.msra.mxu0 %v2670
    %2672 = vmatprep.subr.mxu0 0.0
    %v2673 = vand.u32 %v123, 4294901760
    %2674 = vmatpush1.msra.mxu0 %v2673
    %2675 = vmatprep.subr.mxu0 0.0
    %v2676 = vand.u32 %v124, 4294901760
    %2677 = vmatpush1.msra.mxu0 %v2676
    %2678 = vmatprep.subr.mxu0 0.0
    %v2679 = vand.u32 %v125, 4294901760
    %2680 = vmatpush1.msra.mxu0 %v2679
    %2681 = vmatprep.subr.mxu0 0.0
    %v2682 = vand.u32 %v126, 4294901760
    %2683 = vmatpush1.msra.mxu0 %v2682
    %2684 = vmatprep.subr.mxu0 0.0
    %v2685 = vand.u32 %v127, 4294901760
    %2686 = vmatpush1.msra.mxu0 %v2685
    %2687 = vmatprep.subr.mxu0 0.0
    %v2688 = vand.u32 %v128, 4294901760
    %2689 = vmatpush1.msra.mxu0 %v2688
    %2690 = vmatprep.subr.mxu0 0.0
    %v2691 = vand.u32 %v129, 4294901760
    %2692 = vmatpush1.msra.mxu0 %v2691
    %2693 = vmatprep.subr.mxu0 0.0
    %v2694 = vand.u32 %v130, 4294901760
    %2695 = vmatpush1.msra.mxu0 %v2694
    %2696 = vmatprep.subr.mxu0 0.0
    %v2697 = vand.u32 %v131, 4294901760
    %2698 = vmatpush1.msra.mxu0 %v2697
    %2699 = vmatprep.subr.mxu0 0.0
    %v2700 = vand.u32 %v132, 4294901760
    %2701 = vmatpush1.msra.mxu0 %v2700
    %2702 = vmatprep.subr.mxu0 0.0
    %v2703 = vand.u32 %v133, 4294901760
    %2704 = vmatpush1.msra.mxu0 %v2703
    %2705 = vmatprep.subr.mxu0 0.0
    %v2706 = vand.u32 %v134, 4294901760
    %2707 = vmatpush1.msra.mxu0 %v2706
    %2708 = vmatprep.subr.mxu0 0.0
    %v2709 = vand.u32 %v135, 4294901760
    %2710 = vmatpush1.msra.mxu0 %v2709
    %2711 = vmatprep.subr.mxu0 0.0
    %v2712 = vand.u32 %v136, 4294901760
    %2713 = vmatpush1.msra.mxu0 %v2712
    %2714 = vmatprep.subr.mxu0 0.0
    %v2715 = vand.u32 %v137, 4294901760
    %2716 = vmatpush1.msra.mxu0 %v2715
    %2717 = vmatprep.subr.mxu0 0.0
    %v2718 = vand.u32 %v138, 4294901760
    %2719 = vmatpush1.msra.mxu0 %v2718
    %2720 = vmatprep.subr.mxu0 0.0
    %v2721 = vand.u32 %v139, 4294901760
    %2722 = vmatpush1.msra.mxu0 %v2721
    %2723 = vmatprep.subr.mxu0 0.0
    %v2724 = vand.u32 %v140, 4294901760
    %2725 = vmatpush1.msra.mxu0 %v2724
    %2726 = vmatprep.subr.mxu0 0.0
    %v2727 = vand.u32 %v141, 4294901760
    %2728 = vmatpush1.msra.mxu0 %v2727
    %2729 = vmatprep.subr.mxu0 0.0
    %v2730 = vand.u32 %v142, 4294901760
    %2731 = vmatpush1.msra.mxu0 %v2730
    %2732 = vmatprep.subr.mxu0 0.0
    %v2733 = vand.u32 %v143, 4294901760
    %2734 = vmatpush1.msra.mxu0 %v2733
    %v2735 = vand.u32 %v46, 4294901760
    %2736 = vmatprep.mubr.f32.mxu0 %v2735
    %v2737 = vand.u32 %v45, 4294901760
    %2738 = vmatmul.mubr.f32.gmra.mrb[0].mxu0 %v2737
    %v2739 = vpop.f32.mrb[0].mxu0
    %v2740 = vadd.f32 %v2636, %v2739
    %v2741 = vpop.f32.mrb[0].mxu0
    %2742 = vdwg.mxu0
    %2743 = vmatprep.subr.mxu0 0.0
    %v2744 = vand.u32 %v144, 4294901760
    %2745 = vmatpush1.msra.mxu0 %v2744
    %2746 = vmatprep.subr.mxu0 0.0
    %v2747 = vand.u32 %v145, 4294901760
    %2748 = vmatpush1.msra.mxu0 %v2747
    %2749 = vmatprep.subr.mxu0 0.0
    %2750 = vmatpush1.msra.mxu0 0.0
    %2751 = vmatprep.subr.mxu0 0.0
    %2752 = vmatpush1.msra.mxu0 0.0
    %2753 = vmatprep.subr.mxu0 0.0
    %2754 = vmatpush1.msra.mxu0 0.0
    %2755 = vmatprep.subr.mxu0 0.0
    %2756 = vmatpush1.msra.mxu0 0.0
    %2757 = vmatprep.subr.mxu0 0.0
    %2758 = vmatpush1.msra.mxu0 0.0
    %2759 = vmatprep.subr.mxu0 0.0
    %2760 = vmatpush1.msra.mxu0 0.0
    %2761 = vmatprep.subr.mxu0 0.0
    %2762 = vmatpush1.msra.mxu0 0.0
    %2763 = vmatprep.subr.mxu0 0.0
    %2764 = vmatpush1.msra.mxu0 0.0
    %2765 = vmatprep.subr.mxu0 0.0
    %2766 = vmatpush1.msra.mxu0 0.0
    %2767 = vmatprep.subr.mxu0 0.0
    %2768 = vmatpush1.msra.mxu0 0.0
    %2769 = vmatprep.subr.mxu0 0.0
    %2770 = vmatpush1.msra.mxu0 0.0
    %2771 = vmatprep.subr.mxu0 0.0
    %2772 = vmatpush1.msra.mxu0 0.0
    %2773 = vmatprep.subr.mxu0 0.0
    %2774 = vmatpush1.msra.mxu0 0.0
    %2775 = vmatprep.subr.mxu0 0.0
    %2776 = vmatpush1.msra.mxu0 0.0
    %2777 = vmatprep.subr.mxu0 0.0
    %2778 = vmatpush1.msra.mxu0 0.0
    %2779 = vmatprep.subr.mxu0 0.0
    %2780 = vmatpush1.msra.mxu0 0.0
    %2781 = vmatprep.subr.mxu0 0.0
    %2782 = vmatpush1.msra.mxu0 0.0
    %2783 = vmatprep.subr.mxu0 0.0
    %2784 = vmatpush1.msra.mxu0 0.0
    %2785 = vmatprep.subr.mxu0 0.0
    %2786 = vmatpush1.msra.mxu0 0.0
    %2787 = vmatprep.subr.mxu0 0.0
    %2788 = vmatpush1.msra.mxu0 0.0
    %2789 = vmatprep.subr.mxu0 0.0
    %2790 = vmatpush1.msra.mxu0 0.0
    %2791 = vmatprep.subr.mxu0 0.0
    %2792 = vmatpush1.msra.mxu0 0.0
    %2793 = vmatprep.subr.mxu0 0.0
    %2794 = vmatpush1.msra.mxu0 0.0
    %2795 = vmatprep.subr.mxu0 0.0
    %2796 = vmatpush1.msra.mxu0 0.0
    %2797 = vmatprep.subr.mxu0 0.0
    %2798 = vmatpush1.msra.mxu0 0.0
    %2799 = vmatprep.subr.mxu0 0.0
    %2800 = vmatpush1.msra.mxu0 0.0
    %2801 = vmatprep.subr.mxu0 0.0
    %2802 = vmatpush1.msra.mxu0 0.0
    %2803 = vmatprep.subr.mxu0 0.0
    %2804 = vmatpush1.msra.mxu0 0.0
    %2805 = vmatprep.subr.mxu0 0.0
    %2806 = vmatpush1.msra.mxu0 0.0
    %2807 = vmatprep.subr.mxu0 0.0
    %2808 = vmatpush1.msra.mxu0 0.0
    %2809 = vmatprep.mubr.f32.mxu0 0.0
    %v2810 = vand.u32 %v155, 4294901760
    %v2811 = vsub.f32 %v155, %v2810
    %v2812 = vand.u32 %v2811, 4294901760
    %v2813 = vsub.f32 %v2811, %v2812
    %v2814 = vand.u32 %v2813, 4294901760
    %2815 = vmatmul.mubr.f32.gmra.mrb[0].mxu0 %v2814
    %v2816 = vpop.f32.mrb[0].mxu0
    %v2817 = vadd.f32 %v2740, %v2816
    %v2818 = vpop.f32.mrb[0].mxu0
    %2819 = vdwg.mxu0
    %2820 = vmatprep.subr.mxu0 0.0
    %v2821 = vand.u32 %v144, 4294901760
    %v2822 = vsub.f32 %v144, %v2821
    %v2823 = vand.u32 %v2822, 4294901760
    %v2824 = vsub.f32 %v2822, %v2823
    %v2825 = vand.u32 %v2824, 4294901760
    %2826 = vmatpush1.msra.mxu0 %v2825
    %2827 = vmatprep.subr.mxu0 0.0
    %v2828 = vand.u32 %v145, 4294901760
    %v2829 = vsub.f32 %v145, %v2828
    %v2830 = vand.u32 %v2829, 4294901760
    %v2831 = vsub.f32 %v2829, %v2830
    %v2832 = vand.u32 %v2831, 4294901760
    %2833 = vmatpush1.msra.mxu0 %v2832
    %2834 = vmatprep.subr.mxu0 0.0
    %2835 = vmatpush1.msra.mxu0 0.0
    %2836 = vmatprep.subr.mxu0 0.0
    %2837 = vmatpush1.msra.mxu0 0.0
    %2838 = vmatprep.subr.mxu0 0.0
    %2839 = vmatpush1.msra.mxu0 0.0
    %2840 = vmatprep.subr.mxu0 0.0
    %2841 = vmatpush1.msra.mxu0 0.0
    %2842 = vmatprep.subr.mxu0 0.0
    %2843 = vmatpush1.msra.mxu0 0.0
    %2844 = vmatprep.subr.mxu0 0.0
    %2845 = vmatpush1.msra.mxu0 0.0
    %2846 = vmatprep.subr.mxu0 0.0
    %2847 = vmatpush1.msra.mxu0 0.0
    %2848 = vmatprep.subr.mxu0 0.0
    %2849 = vmatpush1.msra.mxu0 0.0
    %2850 = vmatprep.subr.mxu0 0.0
    %2851 = vmatpush1.msra.mxu0 0.0
    %2852 = vmatprep.subr.mxu0 0.0
    %2853 = vmatpush1.msra.mxu0 0.0
    %2854 = vmatprep.subr.mxu0 0.0
    %2855 = vmatpush1.msra.mxu0 0.0
    %2856 = vmatprep.subr.mxu0 0.0
    %2857 = vmatpush1.msra.mxu0 0.0
    %2858 = vmatprep.subr.mxu0 0.0
    %2859 = vmatpush1.msra.mxu0 0.0
    %2860 = vmatprep.subr.mxu0 0.0
    %2861 = vmatpush1.msra.mxu0 0.0
    %2862 = vmatprep.subr.mxu0 0.0
    %2863 = vmatpush1.msra.mxu0 0.0
    %2864 = vmatprep.subr.mxu0 0.0
    %2865 = vmatpush1.msra.mxu0 0.0
    %2866 = vmatprep.subr.mxu0 0.0
    %2867 = vmatpush1.msra.mxu0 0.0
    %2868 = vmatprep.subr.mxu0 0.0
    %2869 = vmatpush1.msra.mxu0 0.0
    %2870 = vmatprep.subr.mxu0 0.0
    %2871 = vmatpush1.msra.mxu0 0.0
    %2872 = vmatprep.subr.mxu0 0.0
    %2873 = vmatpush1.msra.mxu0 0.0
    %2874 = vmatprep.subr.mxu0 0.0
    %2875 = vmatpush1.msra.mxu0 0.0
    %2876 = vmatprep.subr.mxu0 0.0
    %2877 = vmatpush1.msra.mxu0 0.0
    %2878 = vmatprep.subr.mxu0 0.0
    %2879 = vmatpush1.msra.mxu0 0.0
    %2880 = vmatprep.subr.mxu0 0.0
    %2881 = vmatpush1.msra.mxu0 0.0
    %2882 = vmatprep.subr.mxu0 0.0
    %2883 = vmatpush1.msra.mxu0 0.0
    %2884 = vmatprep.subr.mxu0 0.0
    %2885 = vmatpush1.msra.mxu0 0.0
    %2886 = vmatprep.subr.mxu0 0.0
    %2887 = vmatpush1.msra.mxu0 0.0
    %2888 = vmatprep.subr.mxu0 0.0
    %2889 = vmatpush1.msra.mxu0 0.0
    %2890 = vmatprep.subr.mxu0 0.0
    %2891 = vmatpush1.msra.mxu0 0.0
    %2892 = vmatprep.subr.mxu0 0.0
    %2893 = vmatpush1.msra.mxu0 0.0
    %2894 = vmatprep.mubr.f32.mxu0 0.0
    %v2895 = vand.u32 %v155, 4294901760
    %2896 = vmatmul.mubr.f32.gmra.mrb[0].mxu0 %v2895
    %v2897 = vpop.f32.mrb[0].mxu0
    %v2898 = vadd.f32 %v2817, %v2897
    %v2899 = vpop.f32.mrb[0].mxu0
    %2900 = vdwg.mxu0
    %2901 = vmatprep.subr.mxu0 0.0
    %v2902 = vand.u32 %v144, 4294901760
    %v2903 = vsub.f32 %v144, %v2902
    %2904 = vmatpush1.msra.mxu0 %v2903
    %2905 = vmatprep.subr.mxu0 0.0
    %v2906 = vand.u32 %v145, 4294901760
    %v2907 = vsub.f32 %v145, %v2906
    %2908 = vmatpush1.msra.mxu0 %v2907
    %2909 = vmatprep.subr.mxu0 0.0
    %2910 = vmatpush1.msra.mxu0 0.0
    %2911 = vmatprep.subr.mxu0 0.0
    %2912 = vmatpush1.msra.mxu0 0.0
    %2913 = vmatprep.subr.mxu0 0.0
    %2914 = vmatpush1.msra.mxu0 0.0
    %2915 = vmatprep.subr.mxu0 0.0
    %2916 = vmatpush1.msra.mxu0 0.0
    %2917 = vmatprep.subr.mxu0 0.0
    %2918 = vmatpush1.msra.mxu0 0.0
    %2919 = vmatprep.subr.mxu0 0.0
    %2920 = vmatpush1.msra.mxu0 0.0
    %2921 = vmatprep.subr.mxu0 0.0
    %2922 = vmatpush1.msra.mxu0 0.0
    %2923 = vmatprep.subr.mxu0 0.0
    %2924 = vmatpush1.msra.mxu0 0.0
    %2925 = vmatprep.subr.mxu0 0.0
    %2926 = vmatpush1.msra.mxu0 0.0
    %2927 = vmatprep.subr.mxu0 0.0
    %2928 = vmatpush1.msra.mxu0 0.0
    %2929 = vmatprep.subr.mxu0 0.0
    %2930 = vmatpush1.msra.mxu0 0.0
    %2931 = vmatprep.subr.mxu0 0.0
    %2932 = vmatpush1.msra.mxu0 0.0
    %2933 = vmatprep.subr.mxu0 0.0
    %2934 = vmatpush1.msra.mxu0 0.0
    %2935 = vmatprep.subr.mxu0 0.0
    %2936 = vmatpush1.msra.mxu0 0.0
    %2937 = vmatprep.subr.mxu0 0.0
    %2938 = vmatpush1.msra.mxu0 0.0
    %2939 = vmatprep.subr.mxu0 0.0
    %2940 = vmatpush1.msra.mxu0 0.0
    %2941 = vmatprep.subr.mxu0 0.0
    %2942 = vmatpush1.msra.mxu0 0.0
    %2943 = vmatprep.subr.mxu0 0.0
    %2944 = vmatpush1.msra.mxu0 0.0
    %2945 = vmatprep.subr.mxu0 0.0
    %2946 = vmatpush1.msra.mxu0 0.0
    %2947 = vmatprep.subr.mxu0 0.0
    %2948 = vmatpush1.msra.mxu0 0.0
    %2949 = vmatprep.subr.mxu0 0.0
    %2950 = vmatpush1.msra.mxu0 0.0
    %2951 = vmatprep.subr.mxu0 0.0
    %2952 = vmatpush1.msra.mxu0 0.0
    %2953 = vmatprep.subr.mxu0 0.0
    %2954 = vmatpush1.msra.mxu0 0.0
    %2955 = vmatprep.subr.mxu0 0.0
    %2956 = vmatpush1.msra.mxu0 0.0
    %2957 = vmatprep.subr.mxu0 0.0
    %2958 = vmatpush1.msra.mxu0 0.0
    %2959 = vmatprep.subr.mxu0 0.0
    %2960 = vmatpush1.msra.mxu0 0.0
    %2961 = vmatprep.subr.mxu0 0.0
    %2962 = vmatpush1.msra.mxu0 0.0
    %2963 = vmatprep.subr.mxu0 0.0
    %2964 = vmatpush1.msra.mxu0 0.0
    %2965 = vmatprep.subr.mxu0 0.0
    %2966 = vmatpush1.msra.mxu0 0.0
    %2967 = vmatprep.subr.mxu0 0.0
    %2968 = vmatpush1.msra.mxu0 0.0
    %2969 = vmatprep.mubr.f32.mxu0 0.0
    %v2970 = vand.u32 %v155, 4294901760
    %v2971 = vsub.f32 %v155, %v2970
    %2972 = vmatmul.mubr.f32.gmra.mrb[0].mxu0 %v2971
    %v2973 = vpop.f32.mrb[0].mxu0
    %v2974 = vadd.f32 %v2898, %v2973
    %v2975 = vpop.f32.mrb[0].mxu0
    %2976 = vdwg.mxu0
    %2977 = vmatprep.subr.mxu0 0.0
    %v2978 = vand.u32 %v144, 4294901760
    %2979 = vmatpush1.msra.mxu0 %v2978
    %2980 = vmatprep.subr.mxu0 0.0
    %v2981 = vand.u32 %v145, 4294901760
    %2982 = vmatpush1.msra.mxu0 %v2981
    %2983 = vmatprep.subr.mxu0 0.0
    %2984 = vmatpush1.msra.mxu0 0.0
    %2985 = vmatprep.subr.mxu0 0.0
    %2986 = vmatpush1.msra.mxu0 0.0
    %2987 = vmatprep.subr.mxu0 0.0
    %2988 = vmatpush1.msra.mxu0 0.0
    %2989 = vmatprep.subr.mxu0 0.0
    %2990 = vmatpush1.msra.mxu0 0.0
    %2991 = vmatprep.subr.mxu0 0.0
    %2992 = vmatpush1.msra.mxu0 0.0
    %2993 = vmatprep.subr.mxu0 0.0
    %2994 = vmatpush1.msra.mxu0 0.0
    %2995 = vmatprep.subr.mxu0 0.0
    %2996 = vmatpush1.msra.mxu0 0.0
    %2997 = vmatprep.subr.mxu0 0.0
    %2998 = vmatpush1.msra.mxu0 0.0
    %2999 = vmatprep.subr.mxu0 0.0
    %3000 = vmatpush1.msra.mxu0 0.0
    %3001 = vmatprep.subr.mxu0 0.0
    %3002 = vmatpush1.msra.mxu0 0.0
    %3003 = vmatprep.subr.mxu0 0.0
    %3004 = vmatpush1.msra.mxu0 0.0
    %3005 = vmatprep.subr.mxu0 0.0
    %3006 = vmatpush1.msra.mxu0 0.0
    %3007 = vmatprep.subr.mxu0 0.0
    %3008 = vmatpush1.msra.mxu0 0.0
    %3009 = vmatprep.subr.mxu0 0.0
    %3010 = vmatpush1.msra.mxu0 0.0
    %3011 = vmatprep.subr.mxu0 0.0
    %3012 = vmatpush1.msra.mxu0 0.0
    %3013 = vmatprep.subr.mxu0 0.0
    %3014 = vmatpush1.msra.mxu0 0.0
    %3015 = vmatprep.subr.mxu0 0.0
    %3016 = vmatpush1.msra.mxu0 0.0
    %3017 = vmatprep.subr.mxu0 0.0
    %3018 = vmatpush1.msra.mxu0 0.0
    %3019 = vmatprep.subr.mxu0 0.0
    %3020 = vmatpush1.msra.mxu0 0.0
    %3021 = vmatprep.subr.mxu0 0.0
    %3022 = vmatpush1.msra.mxu0 0.0
    %3023 = vmatprep.subr.mxu0 0.0
    %3024 = vmatpush1.msra.mxu0 0.0
    %3025 = vmatprep.subr.mxu0 0.0
    %3026 = vmatpush1.msra.mxu0 0.0
    %3027 = vmatprep.subr.mxu0 0.0
    %3028 = vmatpush1.msra.mxu0 0.0
    %3029 = vmatprep.subr.mxu0 0.0
    %3030 = vmatpush1.msra.mxu0 0.0
    %3031 = vmatprep.subr.mxu0 0.0
    %3032 = vmatpush1.msra.mxu0 0.0
    %3033 = vmatprep.subr.mxu0 0.0
    %3034 = vmatpush1.msra.mxu0 0.0
    %3035 = vmatprep.subr.mxu0 0.0
    %3036 = vmatpush1.msra.mxu0 0.0
    %3037 = vmatprep.subr.mxu0 0.0
    %3038 = vmatpush1.msra.mxu0 0.0
    %3039 = vmatprep.subr.mxu0 0.0
    %3040 = vmatpush1.msra.mxu0 0.0
    %3041 = vmatprep.subr.mxu0 0.0
    %3042 = vmatpush1.msra.mxu0 0.0
    %3043 = vmatprep.mubr.f32.mxu0 0.0
    %v3044 = vand.u32 %v155, 4294901760
    %v3045 = vsub.f32 %v155, %v3044
    %v3046 = vand.u32 %v3045, 4294901760
    %3047 = vmatmul.mubr.f32.gmra.mrb[0].mxu0 %v3046
    %v3048 = vpop.f32.mrb[0].mxu0
    %v3049 = vadd.f32 %v2974, %v3048
    %v3050 = vpop.f32.mrb[0].mxu0
    %3051 = vdwg.mxu0
    %3052 = vmatprep.subr.mxu0 0.0
    %v3053 = vand.u32 %v144, 4294901760
    %v3054 = vsub.f32 %v144, %v3053
    %v3055 = vand.u32 %v3054, 4294901760
    %3056 = vmatpush1.msra.mxu0 %v3055
    %3057 = vmatprep.subr.mxu0 0.0
    %v3058 = vand.u32 %v145, 4294901760
    %v3059 = vsub.f32 %v145, %v3058
    %v3060 = vand.u32 %v3059, 4294901760
    %3061 = vmatpush1.msra.mxu0 %v3060
    %3062 = vmatprep.subr.mxu0 0.0
    %3063 = vmatpush1.msra.mxu0 0.0
    %3064 = vmatprep.subr.mxu0 0.0
    %3065 = vmatpush1.msra.mxu0 0.0
    %3066 = vmatprep.subr.mxu0 0.0
    %3067 = vmatpush1.msra.mxu0 0.0
    %3068 = vmatprep.subr.mxu0 0.0
    %3069 = vmatpush1.msra.mxu0 0.0
    %3070 = vmatprep.subr.mxu0 0.0
    %3071 = vmatpush1.msra.mxu0 0.0
    %3072 = vmatprep.subr.mxu0 0.0
    %3073 = vmatpush1.msra.mxu0 0.0
    %3074 = vmatprep.subr.mxu0 0.0
    %3075 = vmatpush1.msra.mxu0 0.0
    %3076 = vmatprep.subr.mxu0 0.0
    %3077 = vmatpush1.msra.mxu0 0.0
    %3078 = vmatprep.subr.mxu0 0.0
    %3079 = vmatpush1.msra.mxu0 0.0
    %3080 = vmatprep.subr.mxu0 0.0
    %3081 = vmatpush1.msra.mxu0 0.0
    %3082 = vmatprep.subr.mxu0 0.0
    %3083 = vmatpush1.msra.mxu0 0.0
    %3084 = vmatprep.subr.mxu0 0.0
    %3085 = vmatpush1.msra.mxu0 0.0
    %3086 = vmatprep.subr.mxu0 0.0
    %3087 = vmatpush1.msra.mxu0 0.0
    %3088 = vmatprep.subr.mxu0 0.0
    %3089 = vmatpush1.msra.mxu0 0.0
    %3090 = vmatprep.subr.mxu0 0.0
    %3091 = vmatpush1.msra.mxu0 0.0
    %3092 = vmatprep.subr.mxu0 0.0
    %3093 = vmatpush1.msra.mxu0 0.0
    %3094 = vmatprep.subr.mxu0 0.0
    %3095 = vmatpush1.msra.mxu0 0.0
    %3096 = vmatprep.subr.mxu0 0.0
    %3097 = vmatpush1.msra.mxu0 0.0
    %3098 = vmatprep.subr.mxu0 0.0
    %3099 = vmatpush1.msra.mxu0 0.0
    %3100 = vmatprep.subr.mxu0 0.0
    %3101 = vmatpush1.msra.mxu0 0.0
    %3102 = vmatprep.subr.mxu0 0.0
    %3103 = vmatpush1.msra.mxu0 0.0
    %3104 = vmatprep.subr.mxu0 0.0
    %3105 = vmatpush1.msra.mxu0 0.0
    %3106 = vmatprep.subr.mxu0 0.0
    %3107 = vmatpush1.msra.mxu0 0.0
    %3108 = vmatprep.subr.mxu0 0.0
    %3109 = vmatpush1.msra.mxu0 0.0
    %3110 = vmatprep.subr.mxu0 0.0
    %3111 = vmatpush1.msra.mxu0 0.0
    %3112 = vmatprep.subr.mxu0 0.0
    %3113 = vmatpush1.msra.mxu0 0.0
    %3114 = vmatprep.subr.mxu0 0.0
    %3115 = vmatpush1.msra.mxu0 0.0
    %3116 = vmatprep.subr.mxu0 0.0
    %3117 = vmatpush1.msra.mxu0 0.0
    %3118 = vmatprep.subr.mxu0 0.0
    %3119 = vmatpush1.msra.mxu0 0.0
    %3120 = vmatprep.subr.mxu0 0.0
    %3121 = vmatpush1.msra.mxu0 0.0
    %3122 = vmatprep.mubr.f32.mxu0 0.0
    %v3123 = vand.u32 %v155, 4294901760
    %3124 = vmatmul.mubr.f32.gmra.mrb[0].mxu0 %v3123
    %v3125 = vpop.f32.mrb[0].mxu0
    %v3126 = vadd.f32 %v3049, %v3125
    %v3127 = vpop.f32.mrb[0].mxu0
    %3128 = vdwg.mxu0
    %3129 = vmatprep.subr.mxu0 0.0
    %v3130 = vand.u32 %v144, 4294901760
    %3131 = vmatpush1.msra.mxu0 %v3130
    %3132 = vmatprep.subr.mxu0 0.0
    %v3133 = vand.u32 %v145, 4294901760
    %3134 = vmatpush1.msra.mxu0 %v3133
    %3135 = vmatprep.subr.mxu0 0.0
    %3136 = vmatpush1.msra.mxu0 0.0
    %3137 = vmatprep.subr.mxu0 0.0
    %3138 = vmatpush1.msra.mxu0 0.0
    %3139 = vmatprep.subr.mxu0 0.0
    %3140 = vmatpush1.msra.mxu0 0.0
    %3141 = vmatprep.subr.mxu0 0.0
    %3142 = vmatpush1.msra.mxu0 0.0
    %3143 = vmatprep.subr.mxu0 0.0
    %3144 = vmatpush1.msra.mxu0 0.0
    %3145 = vmatprep.subr.mxu0 0.0
    %3146 = vmatpush1.msra.mxu0 0.0
    %3147 = vmatprep.subr.mxu0 0.0
    %3148 = vmatpush1.msra.mxu0 0.0
    %3149 = vmatprep.subr.mxu0 0.0
    %3150 = vmatpush1.msra.mxu0 0.0
    %3151 = vmatprep.subr.mxu0 0.0
    %3152 = vmatpush1.msra.mxu0 0.0
    %3153 = vmatprep.subr.mxu0 0.0
    %3154 = vmatpush1.msra.mxu0 0.0
    %3155 = vmatprep.subr.mxu0 0.0
    %3156 = vmatpush1.msra.mxu0 0.0
    %3157 = vmatprep.subr.mxu0 0.0
    %3158 = vmatpush1.msra.mxu0 0.0
    %3159 = vmatprep.subr.mxu0 0.0
    %3160 = vmatpush1.msra.mxu0 0.0
    %3161 = vmatprep.subr.mxu0 0.0
    %3162 = vmatpush1.msra.mxu0 0.0
    %3163 = vmatprep.subr.mxu0 0.0
    %3164 = vmatpush1.msra.mxu0 0.0
    %3165 = vmatprep.subr.mxu0 0.0
    %3166 = vmatpush1.msra.mxu0 0.0
    %3167 = vmatprep.subr.mxu0 0.0
    %3168 = vmatpush1.msra.mxu0 0.0
    %3169 = vmatprep.subr.mxu0 0.0
    %3170 = vmatpush1.msra.mxu0 0.0
    %3171 = vmatprep.subr.mxu0 0.0
    %3172 = vmatpush1.msra.mxu0 0.0
    %3173 = vmatprep.subr.mxu0 0.0
    %3174 = vmatpush1.msra.mxu0 0.0
    %3175 = vmatprep.subr.mxu0 0.0
    %3176 = vmatpush1.msra.mxu0 0.0
    %3177 = vmatprep.subr.mxu0 0.0
    %3178 = vmatpush1.msra.mxu0 0.0
    %3179 = vmatprep.subr.mxu0 0.0
    %3180 = vmatpush1.msra.mxu0 0.0
    %3181 = vmatprep.subr.mxu0 0.0
    %3182 = vmatpush1.msra.mxu0 0.0
    %3183 = vmatprep.subr.mxu0 0.0
    %3184 = vmatpush1.msra.mxu0 0.0
    %3185 = vmatprep.subr.mxu0 0.0
    %3186 = vmatpush1.msra.mxu0 0.0
    %3187 = vmatprep.subr.mxu0 0.0
    %3188 = vmatpush1.msra.mxu0 0.0
    %3189 = vmatprep.subr.mxu0 0.0
    %3190 = vmatpush1.msra.mxu0 0.0
    %3191 = vmatprep.subr.mxu0 0.0
    %3192 = vmatpush1.msra.mxu0 0.0
    %3193 = vmatprep.subr.mxu0 0.0
    %3194 = vmatpush1.msra.mxu0 0.0
    %3195 = vmatprep.mubr.f32.mxu0 0.0
    %v3196 = vand.u32 %v155, 4294901760
    %3197 = vmatmul.mubr.f32.gmra.mrb[0].mxu0 %v3196
    %v3198 = vpop.f32.mrb[0].mxu0
    %v3199 = vadd.f32 %v3126, %v3198
    %v3200 = vpop.f32.mrb[0].mxu0
    %3201 = vdwg.mxu0
    %3202 = vmax.xlane.f32.xlu0 %v3199
    %v3203 = vpop.xlane.xlu0 %3202
    %v3204 = vsub.f32 %v3199, %v3203
    %v3205 = vmul.f32 %v3204, 1.442695
    %v3206 = vpow.pop %v3205
    %3207 = vadd.xlane.f32.xlu0 %v3206
    %v3208 = vpop.xlane.xlu0 %3207
    %v3209 = vrcp.pop %v3208
    %v3210 = vmul.f32 %v3206, %v3209
    %vm3211 = vcmask 80896
    %3212 = vst.msk [vmem:[#allocation7] sm:$0xff] %vm3211, %v3210
    // Predicated region
    $region22: #{tpu_custom_call.1} parent=1 // pred_check
      _
    $region23: #{tpu_custom_call.1} parent=1 // pred_check_branch
      %3214 = sbr.rel (0) target = $region25
    $region24: #{tpu_custom_call.1} parent=1 // pred_region
      %s3216 = ssub.s32 128, 128
      %3217 = vsyncadd [#allocation4], %s3216
      %s3219 = sshll.u32 [#allocation7], 4
      %s3220 = int_to_ptr.vmem [resolvable:$true] %s3219
      %3222 = dma.vmem_to_hbm [thread:$0]  %s3220, 128, %s3, [#allocation4]
    $region25: #{tpu_custom_call.1} parent=1 // pred_fallthru
      _
    // Predicated region
    $region26: #{tpu_custom_call.1} parent=1 // pred_check
      _
    $region27: #{tpu_custom_call.1} parent=1 // pred_check_branch
      %3224 = sbr.rel (0) target = $region29
    $region28: #{tpu_custom_call.1} parent=1 // pred_region
      %3225 = dma.done [#allocation4], 128
    $region29: #{tpu_custom_call.1} parent=1 // pred_fallthru
      _
    %3226 = vsyncpa [#allocation3], 1
    %3227 = vsyncpa [#allocation6], 1
    %3228 = vsyncpa [#allocation4], 1

</llo_original>
